<compile_context>
chip_gen: v7x
topology: tpu7x:2x2x1
jax: 0.10.0
libtpu: 0.0.40
codegen_flags: <defaults>
</compile_context>

<pallas_src>
import jax
import jax.numpy as jnp
from jax import lax
from jax.experimental import pallas as pl
from jax.experimental.pallas import tpu as pltpu


# ----------------------------------------------------------------------------------
# Fused kernel: GATConv -> GRU -> predictor_1 -> predictor_2
# ----------------------------------------------------------------------------------
def gatgru_kernel(x_ref, w_ref, aboth_ref, maskb_ref, gbias_ref,
                  wihbd_ref, bihw_ref, whh_ref, bhh_ref,
                  wpred_ref, obias_ref, out_ref, hall_ref):
    # x_ref:     [M, Fin]                  (Fin = Cin*T)
    # w_ref:     [Fin, heads*Ct]           (Ct = Cgat*T)
    # aboth_ref: [heads*Ct, 2*heads]  block-diag [att_dst | att_src] (merged)
    # maskb_ref: [M, M]   additive mask: 0 on edges (incl. self loops), -1e30 off
    # gbias_ref: [1, Ct]
    # wihbd_ref: [Ct, T*GSTEP]  block-diag of (128-lane padded) GRU W_ih
    # bihw_ref:  [1, T*GSTEP]
    # whh_ref:   [H, GSTEP]  (cols 0:3H = W_hh, gate order r,z,n; rest zero)
    # bhh_ref:   [1, GSTEP]
    # wpred_ref: [T*H, Ppad] fused predictor weight (wrapper-built), obias_ref: [1, Ppad]
    # out_ref:   [M, Ppad]
    # hall_ref:  [M, T*H] VMEM scratch accumulator for the GRU hidden states
    heads = aboth_ref.shape[1] // 2
    ct = gbias_ref.shape[1]
    m = x_ref.shape[0]
    hdim = whh_ref.shape[0]
    gstep = whh_ref.shape[1]                 # 128-lane padded per-step gate width
    t_len = wpred_ref.shape[0] // hdim

    # ---------------- GAT: dense masked attention, all heads batched ----------------
    x = x_ref[...]
    xp = jnp.dot(x, w_ref[...], preferred_element_type=jnp.float32)          # [M, heads*Ct]

    # one merged per-node score matmul for all heads (dst scores then src scores)
    scores = jnp.dot(xp, aboth_ref[...], preferred_element_type=jnp.float32)  # [M, 2*heads]
    st = jnp.transpose(scores)                                                # [2*heads, M]
    a_dst_t = st[:heads]                                                      # [heads, M]
    a_src_t = st[heads:]                                                      # [heads, M]

    e = a_dst_t[:, :, None] + a_src_t[:, None, :]                            # [heads, M, M]
    e = jnp.where(e > 0.0, e, 0.2 * e)                                       # LeakyReLU(0.2)
    e = e + maskb_ref[...][None, :, :]                                       # additive edge mask
    mx = jnp.max(e, axis=-1, keepdims=True)
    p = jnp.exp(e - mx)
    attn = p * pl.reciprocal(jnp.sum(p, axis=-1, keepdims=True), approx=True)  # [heads, M, M]

    acc = jnp.zeros((m, ct), jnp.float32)
    for h in range(heads):                                                   # static (3)
        acc = acc + jnp.dot(attn[h], xp[:, h * ct:(h + 1) * ct],
                            preferred_element_type=jnp.float32)
    gat_out = acc * (1.0 / heads) + gbias_ref[...]                           # [M, Ct]

    # -------- GRU: input projection hoisted off the recurrence (one matmul) --------
    gi_wide = jnp.dot(gat_out, wihbd_ref[...],
                      preferred_element_type=jnp.float32) + bihw_ref[...]    # [M, T*GSTEP]
    whh = whh_ref[...]
    bhh = bhh_ref[...]

    h = jnp.zeros((m, hdim), jnp.float32)
    for t in range(t_len):                                                   # fully unrolled (T=8)
        gi = gi_wide[:, t * gstep:(t + 1) * gstep]                           # 128-aligned view
        # identical shape every step -> Mosaic can keep whh staged in MXU weight regs
        gh = jnp.dot(h, whh, preferred_element_type=jnp.float32) + bhh       # [M, GSTEP]
        r = jax.nn.sigmoid(gi[:, :hdim] + gh[:, :hdim])
        z = jax.nn.sigmoid(gi[:, hdim:2 * hdim] + gh[:, hdim:2 * hdim])
        n = jnp.tanh(gi[:, 2 * hdim:3 * hdim] + r * gh[:, 2 * hdim:3 * hdim])
        h = (1.0 - z) * n + z * h
        hall_ref[:, t * hdim:(t + 1) * hdim] = h                             # off the serial chain

    # predictors fused into one lane-dense matmul after the recurrence
    out_ref[...] = jnp.dot(hall_ref[...], wpred_ref[...],
                           preferred_element_type=jnp.float32) + obias_ref[...]


# ----------------------------------------------------------------------------------
# Wrapper (parameter re-layout is pure plumbing, fused under jit)
# ----------------------------------------------------------------------------------
@jax.jit
def gatgru_forward(params, x, adj):
    B, N, T, Cin = x.shape
    M = B * N
    heads = params["gat_att_src"].shape[0]
    cgat = params["gru_wih"].shape[0]
    H = params["gru_whh"].shape[0]
    P = params["p2_w"].shape[0]
    ct = cgat * T
    GSTEP = 128                      # 128-lane padded per-timestep GRU block (>= 3H)
    P_PAD = 128                      # lane-dense output width (sliced back to P below)

    gat_in = x.reshape(M, T * Cin).astype(jnp.float32)                       # [M, Fin]

    # block-diag att vectors, dst/src merged into one score matmul operand
    eye_h = jnp.eye(heads, dtype=jnp.float32)
    adst_bd = (params["gat_att_dst"][:, :, None] * eye_h[:, None, :]).reshape(heads * ct, heads)
    asrc_bd = (params["gat_att_src"][:, :, None] * eye_h[:, None, :]).reshape(heads * ct, heads)
    a_both = jnp.concatenate([adst_bd, asrc_bd], axis=1)                     # [heads*ct, 2*heads]

    # additive attention mask computed wrapper-side (kernel just adds it)
    mask_bias = jnp.where(adj > 0.5, 0.0, -1e30).astype(jnp.float32)         # [M, M]

    # GRU input projection: pad the 3H gate block to a 128-lane stride per step,
    # then block-diagonal over T so one matmul hoists the whole projection.
    wih_pad = jnp.zeros((cgat, GSTEP), jnp.float32).at[:, :3 * H].set(params["gru_wih"])
    bih_pad = jnp.zeros((1, GSTEP), jnp.float32).at[:, :3 * H].set(params["gru_bih"])
    wih_bd = jnp.kron(jnp.eye(T, dtype=jnp.float32), wih_pad)                # [T*cgat, T*GSTEP]
    bih_wide = jnp.tile(bih_pad, (1, T))                                     # [1, T*GSTEP]
    whh_pad = jnp.zeros((H, GSTEP), jnp.float32).at[:, :3 * H].set(params["gru_whh"])
    bhh_pad = jnp.zeros((1, GSTEP), jnp.float32).at[:, :3 * H].set(params["gru_bhh"])

    # fused predictors: out = h_all[M, T*H] @ W_pred + obias, with
    # W_pred[t*H:(t+1)*H, :] = p1_w.T @ p2_w.T[t:t+1, :]  (rank-1 blocks)
    w1_col = params["p1_w"].T                                                # [H, 1]
    w2t = params["p2_w"].T                                                   # [T, P]
    w_pred = (w2t[:, None, :] * w1_col[None, :, :]).reshape(T * H, P)        # [T*H, P]
    w_pred = jnp.zeros((T * H, P_PAD), jnp.float32).at[:, :P].set(w_pred)
    obias = (params["p1_b"][0, 0] * jnp.sum(params["p2_w"], axis=1)
             + params["p2_b"][:, 0])                                         # [P]
    obias_pad = jnp.zeros((1, P_PAD), jnp.float32).at[0, :P].set(obias)

    # TODO(synk): for large graphs (M >~ 2k) the dense [M,M] attention must be
    # row-tiled with a parallel grid axis; size tiles for 64 MiB VMEM on v7x
    # (128 MiB on v5e/v6e, raise vmem_limit_bytes via CompilerParams), use
    # bf16 matmul operands on v6e/v7x (keep elementwise math f32, esp. on v5e),
    # and keep tiles 128-multiples on v5e. At M=16 everything fits with no grid.
    out_mp = pl.pallas_call(
        gatgru_kernel,
        out_shape=jax.ShapeDtypeStruct((M, P_PAD), jnp.float32),
        in_specs=[pl.BlockSpec(memory_space=pltpu.MemorySpace.VMEM)] * 11,
        out_specs=pl.BlockSpec(memory_space=pltpu.MemorySpace.VMEM),
        scratch_shapes=[pltpu.VMEM((M, T * H), jnp.float32)],
    )(gat_in, params["gat_w"], a_both, mask_bias, params["gat_bias"],
      wih_bd, bih_wide, whh_pad, bhh_pad, w_pred, obias_pad)                 # [M, P_PAD]

    return out_mp[:, :P].reshape(B, N, P).transpose(0, 2, 1)                 # [B, P, N]


# ----------------------------------------------------------------------------------
# Parameters, graph, pure-JAX reference
# ----------------------------------------------------------------------------------
def init_params(key, cfg):
    T = cfg["history_len"]
    cin, cgat = cfg["gat_in_channel"], cfg["gat_out_channel"]
    H, P = cfg["hidden"], cfg["prediction_len"]
    fin, cout = cin * T, cgat * T
    ks = jax.random.split(key, 12)
    nrm = lambda k, s, sc: sc * jax.random.normal(k, s, jnp.float32)
    return {
        "gat_w":       nrm(ks[0], (fin, 3 * cout), 0.2),
        "gat_att_src": nrm(ks[1], (3, cout), 0.2),
        "gat_att_dst": nrm(ks[2], (3, cout), 0.2),
        "gat_bias":    nrm(ks[3], (1, cout), 0.1),
        "gru_wih":     nrm(ks[4], (cgat, 3 * H), 0.2),
        "gru_whh":     nrm(ks[5], (H, 3 * H), 0.2),
        "gru_bih":     nrm(ks[6], (1, 3 * H), 0.1),
        "gru_bhh":     nrm(ks[7], (1, 3 * H), 0.1),
        "p1_w":        nrm(ks[8], (1, H), 0.2),
        "p1_b":        nrm(ks[9], (1, 1), 0.1),
        "p2_w":        nrm(ks[10], (P, T), 0.2),
        "p2_b":        nrm(ks[11], (P, 1), 0.1),
    }


def build_adjacency(batch, nodes):
    """Ring graph (bidirectional) within each sample + self loops; adj[dst, src]=1."""
    m = batch * nodes
    src, dst = [], []
    for b in range(batch):
        for n in range(nodes):
            s = b * nodes + n
            d = b * nodes + (n + 1) % nodes
            src += [s, d]
            dst += [d, s]
    adj = jnp.zeros((m, m), jnp.float32)
    adj = adj.at[jnp.array(dst), jnp.array(src)].set(1.0)
    adj = jnp.maximum(adj, jnp.eye(m, dtype=jnp.float32))  # add_self_loops=True
    return adj


def reference_forward(params, x, adj, cfg):
    B, N, T, Cin = x.shape
    M = B * N
    cgat, H, P = cfg["gat_out_channel"], cfg["hidden"], cfg["prediction_len"]
    cout = cgat * T

    gx = x.reshape(M, T * Cin)
    xp = gx @ params["gat_w"]
    acc = jnp.zeros((M, cout), jnp.float32)
    for h in range(3):
        xh = xp[:, h * cout:(h + 1) * cout]
        a_s = jnp.sum(xh * params["gat_att_src"][h], axis=-1)
        a_d = jnp.sum(xh * params["gat_att_dst"][h], axis=-1)
        e = a_d[:, None] + a_s[None, :]
        e = jnp.where(e > 0.0, e, 0.2 * e)
        e = jnp.where(adj > 0.5, e, -1e30)
        acc = acc + jax.nn.softmax(e, axis=-1) @ xh
    gat_out = acc / 3.0 + params["gat_bias"][0]

    xs = gat_out.reshape(M, T, cgat).transpose(1, 0, 2)                  # [T, M, C]

    def gru_step(h, x_t):
        gi = x_t @ params["gru_wih"] + params["gru_bih"][0]
        gh = h @ params["gru_whh"] + params["gru_bhh"][0]
        r = jax.nn.sigmoid(gi[:, :H] + gh[:, :H])
        z = jax.nn.sigmoid(gi[:, H:2 * H] + gh[:, H:2 * H])
        n = jnp.tanh(gi[:, 2 * H:] + r * gh[:, 2 * H:])
        h_new = (1.0 - z) * n + z * h
        return h_new, h_new

    _, hs = lax.scan(gru_step, jnp.zeros((M, H), jnp.float32), xs)        # [T, M, H]
    o1 = jnp.sum(hs * params["p1_w"][0][None, None, :], axis=-1) + params["p1_b"][0, 0]
    out = params["p2_w"] @ o1 + params["p2_b"]                            # [P, M]
    return out.reshape(P, B, N).transpose(1, 0, 2)                        # [B, P, N]


# ----------------------------------------------------------------------------------
if __name__ == "__main__":
    cfg = dict(gat_in_channel=4, gat_out_channel=4, hidden=32,
               output_dim=1, history_len=8, prediction_len=4)
    B, N = 2, 8
    T, Cin = cfg["history_len"], cfg["gat_in_channel"]

    key = jax.random.PRNGKey(0)
    kx, kp = jax.random.split(key)
    x = jax.random.normal(kx, (B, N, T, Cin), jnp.float32)   # data.x
    adj = build_adjacency(B, N)                              # dense form of data.edge_index
    params = init_params(kp, cfg)

    out = gatgru_forward(params, x, adj)
    out = jax.block_until_ready(out)

    assert out.shape == (B, cfg["prediction_len"], N), out.shape
    assert bool(jnp.all(jnp.isfinite(out)))

    ref = reference_forward(params, x, adj, cfg)
    assert bool(jnp.allclose(out, ref, atol=2e-2, rtol=2e-2)), \
        float(jnp.max(jnp.abs(out - ref)))

    print("KERNEL_OK")
</pallas_src>

<mosaic_0001>
module attributes {stable_mosaic.version = 11 : i64} {
  func.func @gatgru_kernel(%arg0: memref<16x32xf32, #tpu.memory_space<vmem>>, %arg1: memref<32x96xf32, #tpu.memory_space<vmem>>, %arg2: memref<96x6xf32, #tpu.memory_space<vmem>>, %arg3: memref<16x16xf32, #tpu.memory_space<vmem>>, %arg4: memref<1x32xf32, #tpu.memory_space<vmem>>, %arg5: memref<32x1024xf32, #tpu.memory_space<vmem>>, %arg6: memref<1x1024xf32, #tpu.memory_space<vmem>>, %arg7: memref<32x128xf32, #tpu.memory_space<vmem>>, %arg8: memref<1x128xf32, #tpu.memory_space<vmem>>, %arg9: memref<256x128xf32, #tpu.memory_space<vmem>>, %arg10: memref<1x128xf32, #tpu.memory_space<vmem>>, %arg11: memref<16x128xf32, #tpu.memory_space<vmem>>, %arg12: memref<16x256xf32, #tpu.memory_space<vmem>>) attributes {dimension_semantics = [], scalar_prefetch = 0 : i64, scratch_operands = 1 : i64, tpu.core_type = #tpu.core_type<tc>} {
    %c0 = arith.constant 0 : index
    %c0_0 = arith.constant 0 : index
    %0 = vector.load %arg0[%c0, %c0_0] : memref<16x32xf32, #tpu.memory_space<vmem>>, vector<16x32xf32>
    %c0_1 = arith.constant 0 : index
    %c0_2 = arith.constant 0 : index
    %1 = vector.load %arg1[%c0_1, %c0_2] : memref<32x96xf32, #tpu.memory_space<vmem>>, vector<32x96xf32>
    %cst = arith.constant dense<0.000000e+00> : vector<16x96xf32>
    %2 = tpu.matmul %0, %1, %cst {dimension_numbers = #tpu.dot_dimension_numbers<[1], [0], [0], [1], [0, 0, 1, 1], [], []>} : vector<16x32xf32>, vector<32x96xf32>, vector<16x96xf32> -> vector<16x96xf32>
    %c0_3 = arith.constant 0 : index
    %c0_4 = arith.constant 0 : index
    %3 = vector.load %arg2[%c0_3, %c0_4] : memref<96x6xf32, #tpu.memory_space<vmem>>, vector<96x6xf32>
    %cst_5 = arith.constant dense<0.000000e+00> : vector<16x6xf32>
    %4 = tpu.matmul %2, %3, %cst_5 {dimension_numbers = #tpu.dot_dimension_numbers<[1], [0], [0], [1], [0, 0, 1, 1], [], []>} : vector<16x96xf32>, vector<96x6xf32>, vector<16x6xf32> -> vector<16x6xf32>
    %5 = tpu.transpose %4, [1, 0] : vector<16x6xf32> -> vector<6x16xf32>
    %6 = vector.extract_strided_slice %5 {offsets = [0, 0], sizes = [3, 16], strides = [1, 1]} : vector<6x16xf32> to vector<3x16xf32>
    %7 = vector.extract_strided_slice %5 {offsets = [3, 0], sizes = [3, 16], strides = [1, 1]} : vector<6x16xf32> to vector<3x16xf32>
    %8 = vector.shape_cast %6 : vector<3x16xf32> to vector<3x16x1xf32>
    %9 = vector.shape_cast %7 : vector<3x16xf32> to vector<3x1x16xf32>
    %10 = vector.broadcast %8 : vector<3x16x1xf32> to vector<3x16x16xf32>
    %11 = vector.broadcast %9 : vector<3x1x16xf32> to vector<3x16x16xf32>
    %12 = arith.addf %10, %11 : vector<3x16x16xf32>
    %cst_6 = arith.constant 0.000000e+00 : f32
    %13 = vector.broadcast %cst_6 : f32 to vector<3x16x16xf32>
    %14 = arith.cmpf ogt, %12, %13 : vector<3x16x16xf32>
    %cst_7 = arith.constant 2.000000e-01 : f32
    %15 = vector.broadcast %cst_7 : f32 to vector<3x16x16xf32>
    %16 = arith.mulf %15, %12 : vector<3x16x16xf32>
    %17 = arith.select %14, %12, %16 : vector<3x16x16xi1>, vector<3x16x16xf32>
    %c0_8 = arith.constant 0 : index
    %c0_9 = arith.constant 0 : index
    %18 = vector.load %arg3[%c0_8, %c0_9] : memref<16x16xf32, #tpu.memory_space<vmem>>, vector<16x16xf32>
    %19 = vector.shape_cast %18 : vector<16x16xf32> to vector<1x16x16xf32>
    %20 = vector.broadcast %19 : vector<1x16x16xf32> to vector<3x16x16xf32>
    %21 = arith.addf %17, %20 : vector<3x16x16xf32>
    %cst_10 = arith.constant dense<0xFF800000> : vector<3x16xf32>
    %22 = vector.multi_reduction <maximumf>, %21, %cst_10 [2] : vector<3x16x16xf32> to vector<3x16xf32>
    %23 = vector.shape_cast %22 : vector<3x16xf32> to vector<3x16x1xf32>
    %24 = vector.broadcast %23 : vector<3x16x1xf32> to vector<3x16x16xf32>
    %25 = arith.subf %21, %24 : vector<3x16x16xf32>
    %26 = math.exp %25 : vector<3x16x16xf32>
    %cst_11 = arith.constant dense<0.000000e+00> : vector<3x16xf32>
    %27 = vector.multi_reduction <add>, %26, %cst_11 [2] : vector<3x16x16xf32> to vector<3x16xf32>
    %28 = vector.shape_cast %27 : vector<3x16xf32> to vector<3x16x1xf32>
    %29 = tpu.reciprocal %28 {approx = true} : vector<3x16x1xf32> -> vector<3x16x1xf32>
    %30 = vector.broadcast %29 : vector<3x16x1xf32> to vector<3x16x16xf32>
    %31 = arith.mulf %26, %30 : vector<3x16x16xf32>
    %cst_12 = arith.constant 0.000000e+00 : f32
    %32 = vector.broadcast %cst_12 : f32 to vector<16x32xf32>
    %33 = vector.extract_strided_slice %31 {offsets = [0, 0, 0], sizes = [1, 16, 16], strides = [1, 1, 1]} : vector<3x16x16xf32> to vector<1x16x16xf32>
    %34 = vector.shape_cast %33 : vector<1x16x16xf32> to vector<16x16xf32>
    %35 = vector.extract_strided_slice %2 {offsets = [0, 0], sizes = [16, 32], strides = [1, 1]} : vector<16x96xf32> to vector<16x32xf32>
    %cst_13 = arith.constant dense<0.000000e+00> : vector<16x32xf32>
    %36 = tpu.matmul %34, %35, %cst_13 {dimension_numbers = #tpu.dot_dimension_numbers<[1], [0], [0], [1], [0, 0, 1, 1], [], []>} : vector<16x16xf32>, vector<16x32xf32>, vector<16x32xf32> -> vector<16x32xf32>
    %37 = arith.addf %32, %36 : vector<16x32xf32>
    %38 = vector.extract_strided_slice %31 {offsets = [1, 0, 0], sizes = [1, 16, 16], strides = [1, 1, 1]} : vector<3x16x16xf32> to vector<1x16x16xf32>
    %39 = vector.shape_cast %38 : vector<1x16x16xf32> to vector<16x16xf32>
    %40 = vector.extract_strided_slice %2 {offsets = [0, 32], sizes = [16, 32], strides = [1, 1]} : vector<16x96xf32> to vector<16x32xf32>
    %cst_14 = arith.constant dense<0.000000e+00> : vector<16x32xf32>
    %41 = tpu.matmul %39, %40, %cst_14 {dimension_numbers = #tpu.dot_dimension_numbers<[1], [0], [0], [1], [0, 0, 1, 1], [], []>} : vector<16x16xf32>, vector<16x32xf32>, vector<16x32xf32> -> vector<16x32xf32>
    %42 = arith.addf %37, %41 : vector<16x32xf32>
    %43 = vector.extract_strided_slice %31 {offsets = [2, 0, 0], sizes = [1, 16, 16], strides = [1, 1, 1]} : vector<3x16x16xf32> to vector<1x16x16xf32>
    %44 = vector.shape_cast %43 : vector<1x16x16xf32> to vector<16x16xf32>
    %45 = vector.extract_strided_slice %2 {offsets = [0, 64], sizes = [16, 32], strides = [1, 1]} : vector<16x96xf32> to vector<16x32xf32>
    %cst_15 = arith.constant dense<0.000000e+00> : vector<16x32xf32>
    %46 = tpu.matmul %44, %45, %cst_15 {dimension_numbers = #tpu.dot_dimension_numbers<[1], [0], [0], [1], [0, 0, 1, 1], [], []>} : vector<16x16xf32>, vector<16x32xf32>, vector<16x32xf32> -> vector<16x32xf32>
    %47 = arith.addf %42, %46 : vector<16x32xf32>
    %cst_16 = arith.constant 0.333333343 : f32
    %48 = vector.broadcast %cst_16 : f32 to vector<16x32xf32>
    %49 = arith.mulf %47, %48 : vector<16x32xf32>
    %c0_17 = arith.constant 0 : index
    %c0_18 = arith.constant 0 : index
    %50 = vector.load %arg4[%c0_17, %c0_18] : memref<1x32xf32, #tpu.memory_space<vmem>>, vector<1x32xf32>
    %51 = vector.broadcast %50 : vector<1x32xf32> to vector<16x32xf32>
    %52 = arith.addf %49, %51 : vector<16x32xf32>
    %c0_19 = arith.constant 0 : index
    %c0_20 = arith.constant 0 : index
    %53 = vector.load %arg5[%c0_19, %c0_20] : memref<32x1024xf32, #tpu.memory_space<vmem>>, vector<32x1024xf32>
    %cst_21 = arith.constant dense<0.000000e+00> : vector<16x1024xf32>
    %54 = tpu.matmul %52, %53, %cst_21 {dimension_numbers = #tpu.dot_dimension_numbers<[1], [0], [0], [1], [0, 0, 1, 1], [], []>} : vector<16x32xf32>, vector<32x1024xf32>, vector<16x1024xf32> -> vector<16x1024xf32>
    %c0_22 = arith.constant 0 : index
    %c0_23 = arith.constant 0 : index
    %55 = vector.load %arg6[%c0_22, %c0_23] : memref<1x1024xf32, #tpu.memory_space<vmem>>, vector<1x1024xf32>
    %56 = vector.broadcast %55 : vector<1x1024xf32> to vector<16x1024xf32>
    %57 = arith.addf %54, %56 : vector<16x1024xf32>
    %c0_24 = arith.constant 0 : index
    %c0_25 = arith.constant 0 : index
    %58 = vector.load %arg7[%c0_24, %c0_25] : memref<32x128xf32, #tpu.memory_space<vmem>>, vector<32x128xf32>
    %c0_26 = arith.constant 0 : index
    %c0_27 = arith.constant 0 : index
    %59 = vector.load %arg8[%c0_26, %c0_27] : memref<1x128xf32, #tpu.memory_space<vmem>>, vector<1x128xf32>
    %cst_28 = arith.constant 0.000000e+00 : f32
    %60 = vector.broadcast %cst_28 : f32 to vector<16x32xf32>
    %61 = vector.extract_strided_slice %57 {offsets = [0, 0], sizes = [16, 128], strides = [1, 1]} : vector<16x1024xf32> to vector<16x128xf32>
    %cst_29 = arith.constant dense<0.000000e+00> : vector<16x128xf32>
    %62 = tpu.matmul %60, %58, %cst_29 {dimension_numbers = #tpu.dot_dimension_numbers<[1], [0], [0], [1], [0, 0, 1, 1], [], []>} : vector<16x32xf32>, vector<32x128xf32>, vector<16x128xf32> -> vector<16x128xf32>
    %63 = vector.broadcast %59 : vector<1x128xf32> to vector<16x128xf32>
    %64 = arith.addf %62, %63 : vector<16x128xf32>
    %65 = vector.extract_strided_slice %61 {offsets = [0, 0], sizes = [16, 32], strides = [1, 1]} : vector<16x128xf32> to vector<16x32xf32>
    %66 = vector.extract_strided_slice %64 {offsets = [0, 0], sizes = [16, 32], strides = [1, 1]} : vector<16x128xf32> to vector<16x32xf32>
    %67 = arith.addf %65, %66 : vector<16x32xf32>
    %68 = arith.negf %67 : vector<16x32xf32>
    %69 = math.exp %68 : vector<16x32xf32>
    %cst_30 = arith.constant 1.000000e+00 : f32
    %70 = vector.broadcast %cst_30 : f32 to vector<16x32xf32>
    %71 = arith.addf %70, %69 : vector<16x32xf32>
    %72 = arith.divf %70, %71 : vector<16x32xf32>
    %73 = vector.extract_strided_slice %61 {offsets = [0, 32], sizes = [16, 32], strides = [1, 1]} : vector<16x128xf32> to vector<16x32xf32>
    %74 = vector.extract_strided_slice %64 {offsets = [0, 32], sizes = [16, 32], strides = [1, 1]} : vector<16x128xf32> to vector<16x32xf32>
    %75 = arith.addf %73, %74 : vector<16x32xf32>
    %76 = arith.negf %75 : vector<16x32xf32>
    %77 = math.exp %76 : vector<16x32xf32>
    %cst_31 = arith.constant 1.000000e+00 : f32
    %78 = vector.broadcast %cst_31 : f32 to vector<16x32xf32>
    %79 = arith.addf %78, %77 : vector<16x32xf32>
    %80 = arith.divf %78, %79 : vector<16x32xf32>
    %81 = vector.extract_strided_slice %61 {offsets = [0, 64], sizes = [16, 32], strides = [1, 1]} : vector<16x128xf32> to vector<16x32xf32>
    %82 = vector.extract_strided_slice %64 {offsets = [0, 64], sizes = [16, 32], strides = [1, 1]} : vector<16x128xf32> to vector<16x32xf32>
    %83 = arith.mulf %72, %82 : vector<16x32xf32>
    %84 = arith.addf %81, %83 : vector<16x32xf32>
    %85 = math.tanh %84 : vector<16x32xf32>
    %cst_32 = arith.constant 1.000000e+00 : f32
    %86 = vector.broadcast %cst_32 : f32 to vector<16x32xf32>
    %87 = arith.subf %86, %80 : vector<16x32xf32>
    %88 = arith.mulf %87, %85 : vector<16x32xf32>
    %89 = arith.mulf %80, %60 : vector<16x32xf32>
    %90 = arith.addf %88, %89 : vector<16x32xf32>
    %c0_33 = arith.constant 0 : index
    %c0_34 = arith.constant 0 : index
    %91 = vector.load %arg12[%c0_33, %c0_34] : memref<16x256xf32, #tpu.memory_space<vmem>>, vector<16x32xf32>
    tpu.vector_store %arg12[%c0_33, %c0_34], %90 {strides = array<i32>} : memref<16x256xf32, #tpu.memory_space<vmem>>, vector<16x32xf32>,
    %92 = vector.extract_strided_slice %57 {offsets = [0, 128], sizes = [16, 128], strides = [1, 1]} : vector<16x1024xf32> to vector<16x128xf32>
    %cst_35 = arith.constant dense<0.000000e+00> : vector<16x128xf32>
    %93 = tpu.matmul %90, %58, %cst_35 {dimension_numbers = #tpu.dot_dimension_numbers<[1], [0], [0], [1], [0, 0, 1, 1], [], []>} : vector<16x32xf32>, vector<32x128xf32>, vector<16x128xf32> -> vector<16x128xf32>
    %94 = vector.broadcast %59 : vector<1x128xf32> to vector<16x128xf32>
    %95 = arith.addf %93, %94 : vector<16x128xf32>
    %96 = vector.extract_strided_slice %92 {offsets = [0, 0], sizes = [16, 32], strides = [1, 1]} : vector<16x128xf32> to vector<16x32xf32>
    %97 = vector.extract_strided_slice %95 {offsets = [0, 0], sizes = [16, 32], strides = [1, 1]} : vector<16x128xf32> to vector<16x32xf32>
    %98 = arith.addf %96, %97 : vector<16x32xf32>
    %99 = arith.negf %98 : vector<16x32xf32>
    %100 = math.exp %99 : vector<16x32xf32>
    %cst_36 = arith.constant 1.000000e+00 : f32
    %101 = vector.broadcast %cst_36 : f32 to vector<16x32xf32>
    %102 = arith.addf %101, %100 : vector<16x32xf32>
    %103 = arith.divf %101, %102 : vector<16x32xf32>
    %104 = vector.extract_strided_slice %92 {offsets = [0, 32], sizes = [16, 32], strides = [1, 1]} : vector<16x128xf32> to vector<16x32xf32>
    %105 = vector.extract_strided_slice %95 {offsets = [0, 32], sizes = [16, 32], strides = [1, 1]} : vector<16x128xf32> to vector<16x32xf32>
    %106 = arith.addf %104, %105 : vector<16x32xf32>
    %107 = arith.negf %106 : vector<16x32xf32>
    %108 = math.exp %107 : vector<16x32xf32>
    %cst_37 = arith.constant 1.000000e+00 : f32
    %109 = vector.broadcast %cst_37 : f32 to vector<16x32xf32>
    %110 = arith.addf %109, %108 : vector<16x32xf32>
    %111 = arith.divf %109, %110 : vector<16x32xf32>
    %112 = vector.extract_strided_slice %92 {offsets = [0, 64], sizes = [16, 32], strides = [1, 1]} : vector<16x128xf32> to vector<16x32xf32>
    %113 = vector.extract_strided_slice %95 {offsets = [0, 64], sizes = [16, 32], strides = [1, 1]} : vector<16x128xf32> to vector<16x32xf32>
    %114 = arith.mulf %103, %113 : vector<16x32xf32>
    %115 = arith.addf %112, %114 : vector<16x32xf32>
    %116 = math.tanh %115 : vector<16x32xf32>
    %cst_38 = arith.constant 1.000000e+00 : f32
    %117 = vector.broadcast %cst_38 : f32 to vector<16x32xf32>
    %118 = arith.subf %117, %111 : vector<16x32xf32>
    %119 = arith.mulf %118, %116 : vector<16x32xf32>
    %120 = arith.mulf %111, %90 : vector<16x32xf32>
    %121 = arith.addf %119, %120 : vector<16x32xf32>
    %c0_39 = arith.constant 0 : index
    %c32 = arith.constant 32 : index
    %122 = vector.load %arg12[%c0_39, %c32] : memref<16x256xf32, #tpu.memory_space<vmem>>, vector<16x32xf32>
    tpu.vector_store %arg12[%c0_39, %c32], %121 {strides = array<i32>} : memref<16x256xf32, #tpu.memory_space<vmem>>, vector<16x32xf32>,
    %123 = vector.extract_strided_slice %57 {offsets = [0, 256], sizes = [16, 128], strides = [1, 1]} : vector<16x1024xf32> to vector<16x128xf32>
    %cst_40 = arith.constant dense<0.000000e+00> : vector<16x128xf32>
    %124 = tpu.matmul %121, %58, %cst_40 {dimension_numbers = #tpu.dot_dimension_numbers<[1], [0], [0], [1], [0, 0, 1, 1], [], []>} : vector<16x32xf32>, vector<32x128xf32>, vector<16x128xf32> -> vector<16x128xf32>
    %125 = vector.broadcast %59 : vector<1x128xf32> to vector<16x128xf32>
    %126 = arith.addf %124, %125 : vector<16x128xf32>
    %127 = vector.extract_strided_slice %123 {offsets = [0, 0], sizes = [16, 32], strides = [1, 1]} : vector<16x128xf32> to vector<16x32xf32>
    %128 = vector.extract_strided_slice %126 {offsets = [0, 0], sizes = [16, 32], strides = [1, 1]} : vector<16x128xf32> to vector<16x32xf32>
    %129 = arith.addf %127, %128 : vector<16x32xf32>
    %130 = arith.negf %129 : vector<16x32xf32>
    %131 = math.exp %130 : vector<16x32xf32>
    %cst_41 = arith.constant 1.000000e+00 : f32
    %132 = vector.broadcast %cst_41 : f32 to vector<16x32xf32>
    %133 = arith.addf %132, %131 : vector<16x32xf32>
    %134 = arith.divf %132, %133 : vector<16x32xf32>
    %135 = vector.extract_strided_slice %123 {offsets = [0, 32], sizes = [16, 32], strides = [1, 1]} : vector<16x128xf32> to vector<16x32xf32>
    %136 = vector.extract_strided_slice %126 {offsets = [0, 32], sizes = [16, 32], strides = [1, 1]} : vector<16x128xf32> to vector<16x32xf32>
    %137 = arith.addf %135, %136 : vector<16x32xf32>
    %138 = arith.negf %137 : vector<16x32xf32>
    %139 = math.exp %138 : vector<16x32xf32>
    %cst_42 = arith.constant 1.000000e+00 : f32
    %140 = vector.broadcast %cst_42 : f32 to vector<16x32xf32>
    %141 = arith.addf %140, %139 : vector<16x32xf32>
    %142 = arith.divf %140, %141 : vector<16x32xf32>
    %143 = vector.extract_strided_slice %123 {offsets = [0, 64], sizes = [16, 32], strides = [1, 1]} : vector<16x128xf32> to vector<16x32xf32>
    %144 = vector.extract_strided_slice %126 {offsets = [0, 64], sizes = [16, 32], strides = [1, 1]} : vector<16x128xf32> to vector<16x32xf32>
    %145 = arith.mulf %134, %144 : vector<16x32xf32>
    %146 = arith.addf %143, %145 : vector<16x32xf32>
    %147 = math.tanh %146 : vector<16x32xf32>
    %cst_43 = arith.constant 1.000000e+00 : f32
    %148 = vector.broadcast %cst_43 : f32 to vector<16x32xf32>
    %149 = arith.subf %148, %142 : vector<16x32xf32>
    %150 = arith.mulf %149, %147 : vector<16x32xf32>
    %151 = arith.mulf %142, %121 : vector<16x32xf32>
    %152 = arith.addf %150, %151 : vector<16x32xf32>
    %c0_44 = arith.constant 0 : index
    %c64 = arith.constant 64 : index
    %153 = vector.load %arg12[%c0_44, %c64] : memref<16x256xf32, #tpu.memory_space<vmem>>, vector<16x32xf32>
    tpu.vector_store %arg12[%c0_44, %c64], %152 {strides = array<i32>} : memref<16x256xf32, #tpu.memory_space<vmem>>, vector<16x32xf32>,
    %154 = vector.extract_strided_slice %57 {offsets = [0, 384], sizes = [16, 128], strides = [1, 1]} : vector<16x1024xf32> to vector<16x128xf32>
    %cst_45 = arith.constant dense<0.000000e+00> : vector<16x128xf32>
    %155 = tpu.matmul %152, %58, %cst_45 {dimension_numbers = #tpu.dot_dimension_numbers<[1], [0], [0], [1], [0, 0, 1, 1], [], []>} : vector<16x32xf32>, vector<32x128xf32>, vector<16x128xf32> -> vector<16x128xf32>
    %156 = vector.broadcast %59 : vector<1x128xf32> to vector<16x128xf32>
    %157 = arith.addf %155, %156 : vector<16x128xf32>
    %158 = vector.extract_strided_slice %154 {offsets = [0, 0], sizes = [16, 32], strides = [1, 1]} : vector<16x128xf32> to vector<16x32xf32>
    %159 = vector.extract_strided_slice %157 {offsets = [0, 0], sizes = [16, 32], strides = [1, 1]} : vector<16x128xf32> to vector<16x32xf32>
    %160 = arith.addf %158, %159 : vector<16x32xf32>
    %161 = arith.negf %160 : vector<16x32xf32>
    %162 = math.exp %161 : vector<16x32xf32>
    %cst_46 = arith.constant 1.000000e+00 : f32
    %163 = vector.broadcast %cst_46 : f32 to vector<16x32xf32>
    %164 = arith.addf %163, %162 : vector<16x32xf32>
    %165 = arith.divf %163, %164 : vector<16x32xf32>
    %166 = vector.extract_strided_slice %154 {offsets = [0, 32], sizes = [16, 32], strides = [1, 1]} : vector<16x128xf32> to vector<16x32xf32>
    %167 = vector.extract_strided_slice %157 {offsets = [0, 32], sizes = [16, 32], strides = [1, 1]} : vector<16x128xf32> to vector<16x32xf32>
    %168 = arith.addf %166, %167 : vector<16x32xf32>
    %169 = arith.negf %168 : vector<16x32xf32>
    %170 = math.exp %169 : vector<16x32xf32>
    %cst_47 = arith.constant 1.000000e+00 : f32
    %171 = vector.broadcast %cst_47 : f32 to vector<16x32xf32>
    %172 = arith.addf %171, %170 : vector<16x32xf32>
    %173 = arith.divf %171, %172 : vector<16x32xf32>
    %174 = vector.extract_strided_slice %154 {offsets = [0, 64], sizes = [16, 32], strides = [1, 1]} : vector<16x128xf32> to vector<16x32xf32>
    %175 = vector.extract_strided_slice %157 {offsets = [0, 64], sizes = [16, 32], strides = [1, 1]} : vector<16x128xf32> to vector<16x32xf32>
    %176 = arith.mulf %165, %175 : vector<16x32xf32>
    %177 = arith.addf %174, %176 : vector<16x32xf32>
    %178 = math.tanh %177 : vector<16x32xf32>
    %cst_48 = arith.constant 1.000000e+00 : f32
    %179 = vector.broadcast %cst_48 : f32 to vector<16x32xf32>
    %180 = arith.subf %179, %173 : vector<16x32xf32>
    %181 = arith.mulf %180, %178 : vector<16x32xf32>
    %182 = arith.mulf %173, %152 : vector<16x32xf32>
    %183 = arith.addf %181, %182 : vector<16x32xf32>
    %c0_49 = arith.constant 0 : index
    %c96 = arith.constant 96 : index
    %184 = vector.load %arg12[%c0_49, %c96] : memref<16x256xf32, #tpu.memory_space<vmem>>, vector<16x32xf32>
    tpu.vector_store %arg12[%c0_49, %c96], %183 {strides = array<i32>} : memref<16x256xf32, #tpu.memory_space<vmem>>, vector<16x32xf32>,
    %185 = vector.extract_strided_slice %57 {offsets = [0, 512], sizes = [16, 128], strides = [1, 1]} : vector<16x1024xf32> to vector<16x128xf32>
    %cst_50 = arith.constant dense<0.000000e+00> : vector<16x128xf32>
    %186 = tpu.matmul %183, %58, %cst_50 {dimension_numbers = #tpu.dot_dimension_numbers<[1], [0], [0], [1], [0, 0, 1, 1], [], []>} : vector<16x32xf32>, vector<32x128xf32>, vector<16x128xf32> -> vector<16x128xf32>
    %187 = vector.broadcast %59 : vector<1x128xf32> to vector<16x128xf32>
    %188 = arith.addf %186, %187 : vector<16x128xf32>
    %189 = vector.extract_strided_slice %185 {offsets = [0, 0], sizes = [16, 32], strides = [1, 1]} : vector<16x128xf32> to vector<16x32xf32>
    %190 = vector.extract_strided_slice %188 {offsets = [0, 0], sizes = [16, 32], strides = [1, 1]} : vector<16x128xf32> to vector<16x32xf32>
    %191 = arith.addf %189, %190 : vector<16x32xf32>
    %192 = arith.negf %191 : vector<16x32xf32>
    %193 = math.exp %192 : vector<16x32xf32>
    %cst_51 = arith.constant 1.000000e+00 : f32
    %194 = vector.broadcast %cst_51 : f32 to vector<16x32xf32>
    %195 = arith.addf %194, %193 : vector<16x32xf32>
    %196 = arith.divf %194, %195 : vector<16x32xf32>
    %197 = vector.extract_strided_slice %185 {offsets = [0, 32], sizes = [16, 32], strides = [1, 1]} : vector<16x128xf32> to vector<16x32xf32>
    %198 = vector.extract_strided_slice %188 {offsets = [0, 32], sizes = [16, 32], strides = [1, 1]} : vector<16x128xf32> to vector<16x32xf32>
    %199 = arith.addf %197, %198 : vector<16x32xf32>
    %200 = arith.negf %199 : vector<16x32xf32>
    %201 = math.exp %200 : vector<16x32xf32>
    %cst_52 = arith.constant 1.000000e+00 : f32
    %202 = vector.broadcast %cst_52 : f32 to vector<16x32xf32>
    %203 = arith.addf %202, %201 : vector<16x32xf32>
    %204 = arith.divf %202, %203 : vector<16x32xf32>
    %205 = vector.extract_strided_slice %185 {offsets = [0, 64], sizes = [16, 32], strides = [1, 1]} : vector<16x128xf32> to vector<16x32xf32>
    %206 = vector.extract_strided_slice %188 {offsets = [0, 64], sizes = [16, 32], strides = [1, 1]} : vector<16x128xf32> to vector<16x32xf32>
    %207 = arith.mulf %196, %206 : vector<16x32xf32>
    %208 = arith.addf %205, %207 : vector<16x32xf32>
    %209 = math.tanh %208 : vector<16x32xf32>
    %cst_53 = arith.constant 1.000000e+00 : f32
    %210 = vector.broadcast %cst_53 : f32 to vector<16x32xf32>
    %211 = arith.subf %210, %204 : vector<16x32xf32>
    %212 = arith.mulf %211, %209 : vector<16x32xf32>
    %213 = arith.mulf %204, %183 : vector<16x32xf32>
    %214 = arith.addf %212, %213 : vector<16x32xf32>
    %c0_54 = arith.constant 0 : index
    %c128 = arith.constant 128 : index
    %215 = vector.load %arg12[%c0_54, %c128] : memref<16x256xf32, #tpu.memory_space<vmem>>, vector<16x32xf32>
    tpu.vector_store %arg12[%c0_54, %c128], %214 {strides = array<i32>} : memref<16x256xf32, #tpu.memory_space<vmem>>, vector<16x32xf32>,
    %216 = vector.extract_strided_slice %57 {offsets = [0, 640], sizes = [16, 128], strides = [1, 1]} : vector<16x1024xf32> to vector<16x128xf32>
    %cst_55 = arith.constant dense<0.000000e+00> : vector<16x128xf32>
    %217 = tpu.matmul %214, %58, %cst_55 {dimension_numbers = #tpu.dot_dimension_numbers<[1], [0], [0], [1], [0, 0, 1, 1], [], []>} : vector<16x32xf32>, vector<32x128xf32>, vector<16x128xf32> -> vector<16x128xf32>
    %218 = vector.broadcast %59 : vector<1x128xf32> to vector<16x128xf32>
    %219 = arith.addf %217, %218 : vector<16x128xf32>
    %220 = vector.extract_strided_slice %216 {offsets = [0, 0], sizes = [16, 32], strides = [1, 1]} : vector<16x128xf32> to vector<16x32xf32>
    %221 = vector.extract_strided_slice %219 {offsets = [0, 0], sizes = [16, 32], strides = [1, 1]} : vector<16x128xf32> to vector<16x32xf32>
    %222 = arith.addf %220, %221 : vector<16x32xf32>
    %223 = arith.negf %222 : vector<16x32xf32>
    %224 = math.exp %223 : vector<16x32xf32>
    %cst_56 = arith.constant 1.000000e+00 : f32
    %225 = vector.broadcast %cst_56 : f32 to vector<16x32xf32>
    %226 = arith.addf %225, %224 : vector<16x32xf32>
    %227 = arith.divf %225, %226 : vector<16x32xf32>
    %228 = vector.extract_strided_slice %216 {offsets = [0, 32], sizes = [16, 32], strides = [1, 1]} : vector<16x128xf32> to vector<16x32xf32>
    %229 = vector.extract_strided_slice %219 {offsets = [0, 32], sizes = [16, 32], strides = [1, 1]} : vector<16x128xf32> to vector<16x32xf32>
    %230 = arith.addf %228, %229 : vector<16x32xf32>
    %231 = arith.negf %230 : vector<16x32xf32>
    %232 = math.exp %231 : vector<16x32xf32>
    %cst_57 = arith.constant 1.000000e+00 : f32
    %233 = vector.broadcast %cst_57 : f32 to vector<16x32xf32>
    %234 = arith.addf %233, %232 : vector<16x32xf32>
    %235 = arith.divf %233, %234 : vector<16x32xf32>
    %236 = vector.extract_strided_slice %216 {offsets = [0, 64], sizes = [16, 32], strides = [1, 1]} : vector<16x128xf32> to vector<16x32xf32>
    %237 = vector.extract_strided_slice %219 {offsets = [0, 64], sizes = [16, 32], strides = [1, 1]} : vector<16x128xf32> to vector<16x32xf32>
    %238 = arith.mulf %227, %237 : vector<16x32xf32>
    %239 = arith.addf %236, %238 : vector<16x32xf32>
    %240 = math.tanh %239 : vector<16x32xf32>
    %cst_58 = arith.constant 1.000000e+00 : f32
    %241 = vector.broadcast %cst_58 : f32 to vector<16x32xf32>
    %242 = arith.subf %241, %235 : vector<16x32xf32>
    %243 = arith.mulf %242, %240 : vector<16x32xf32>
    %244 = arith.mulf %235, %214 : vector<16x32xf32>
    %245 = arith.addf %243, %244 : vector<16x32xf32>
    %c0_59 = arith.constant 0 : index
    %c160 = arith.constant 160 : index
    %246 = vector.load %arg12[%c0_59, %c160] : memref<16x256xf32, #tpu.memory_space<vmem>>, vector<16x32xf32>
    tpu.vector_store %arg12[%c0_59, %c160], %245 {strides = array<i32>} : memref<16x256xf32, #tpu.memory_space<vmem>>, vector<16x32xf32>,
    %247 = vector.extract_strided_slice %57 {offsets = [0, 768], sizes = [16, 128], strides = [1, 1]} : vector<16x1024xf32> to vector<16x128xf32>
    %cst_60 = arith.constant dense<0.000000e+00> : vector<16x128xf32>
    %248 = tpu.matmul %245, %58, %cst_60 {dimension_numbers = #tpu.dot_dimension_numbers<[1], [0], [0], [1], [0, 0, 1, 1], [], []>} : vector<16x32xf32>, vector<32x128xf32>, vector<16x128xf32> -> vector<16x128xf32>
    %249 = vector.broadcast %59 : vector<1x128xf32> to vector<16x128xf32>
    %250 = arith.addf %248, %249 : vector<16x128xf32>
    %251 = vector.extract_strided_slice %247 {offsets = [0, 0], sizes = [16, 32], strides = [1, 1]} : vector<16x128xf32> to vector<16x32xf32>
    %252 = vector.extract_strided_slice %250 {offsets = [0, 0], sizes = [16, 32], strides = [1, 1]} : vector<16x128xf32> to vector<16x32xf32>
    %253 = arith.addf %251, %252 : vector<16x32xf32>
    %254 = arith.negf %253 : vector<16x32xf32>
    %255 = math.exp %254 : vector<16x32xf32>
    %cst_61 = arith.constant 1.000000e+00 : f32
    %256 = vector.broadcast %cst_61 : f32 to vector<16x32xf32>
    %257 = arith.addf %256, %255 : vector<16x32xf32>
    %258 = arith.divf %256, %257 : vector<16x32xf32>
    %259 = vector.extract_strided_slice %247 {offsets = [0, 32], sizes = [16, 32], strides = [1, 1]} : vector<16x128xf32> to vector<16x32xf32>
    %260 = vector.extract_strided_slice %250 {offsets = [0, 32], sizes = [16, 32], strides = [1, 1]} : vector<16x128xf32> to vector<16x32xf32>
    %261 = arith.addf %259, %260 : vector<16x32xf32>
    %262 = arith.negf %261 : vector<16x32xf32>
    %263 = math.exp %262 : vector<16x32xf32>
    %cst_62 = arith.constant 1.000000e+00 : f32
    %264 = vector.broadcast %cst_62 : f32 to vector<16x32xf32>
    %265 = arith.addf %264, %263 : vector<16x32xf32>
    %266 = arith.divf %264, %265 : vector<16x32xf32>
    %267 = vector.extract_strided_slice %247 {offsets = [0, 64], sizes = [16, 32], strides = [1, 1]} : vector<16x128xf32> to vector<16x32xf32>
    %268 = vector.extract_strided_slice %250 {offsets = [0, 64], sizes = [16, 32], strides = [1, 1]} : vector<16x128xf32> to vector<16x32xf32>
    %269 = arith.mulf %258, %268 : vector<16x32xf32>
    %270 = arith.addf %267, %269 : vector<16x32xf32>
    %271 = math.tanh %270 : vector<16x32xf32>
    %cst_63 = arith.constant 1.000000e+00 : f32
    %272 = vector.broadcast %cst_63 : f32 to vector<16x32xf32>
    %273 = arith.subf %272, %266 : vector<16x32xf32>
    %274 = arith.mulf %273, %271 : vector<16x32xf32>
    %275 = arith.mulf %266, %245 : vector<16x32xf32>
    %276 = arith.addf %274, %275 : vector<16x32xf32>
    %c0_64 = arith.constant 0 : index
    %c192 = arith.constant 192 : index
    %277 = vector.load %arg12[%c0_64, %c192] : memref<16x256xf32, #tpu.memory_space<vmem>>, vector<16x32xf32>
    tpu.vector_store %arg12[%c0_64, %c192], %276 {strides = array<i32>} : memref<16x256xf32, #tpu.memory_space<vmem>>, vector<16x32xf32>,
    %278 = vector.extract_strided_slice %57 {offsets = [0, 896], sizes = [16, 128], strides = [1, 1]} : vector<16x1024xf32> to vector<16x128xf32>
    %cst_65 = arith.constant dense<0.000000e+00> : vector<16x128xf32>
    %279 = tpu.matmul %276, %58, %cst_65 {dimension_numbers = #tpu.dot_dimension_numbers<[1], [0], [0], [1], [0, 0, 1, 1], [], []>} : vector<16x32xf32>, vector<32x128xf32>, vector<16x128xf32> -> vector<16x128xf32>
    %280 = vector.broadcast %59 : vector<1x128xf32> to vector<16x128xf32>
    %281 = arith.addf %279, %280 : vector<16x128xf32>
    %282 = vector.extract_strided_slice %278 {offsets = [0, 0], sizes = [16, 32], strides = [1, 1]} : vector<16x128xf32> to vector<16x32xf32>
    %283 = vector.extract_strided_slice %281 {offsets = [0, 0], sizes = [16, 32], strides = [1, 1]} : vector<16x128xf32> to vector<16x32xf32>
    %284 = arith.addf %282, %283 : vector<16x32xf32>
    %285 = arith.negf %284 : vector<16x32xf32>
    %286 = math.exp %285 : vector<16x32xf32>
    %cst_66 = arith.constant 1.000000e+00 : f32
    %287 = vector.broadcast %cst_66 : f32 to vector<16x32xf32>
    %288 = arith.addf %287, %286 : vector<16x32xf32>
    %289 = arith.divf %287, %288 : vector<16x32xf32>
    %290 = vector.extract_strided_slice %278 {offsets = [0, 32], sizes = [16, 32], strides = [1, 1]} : vector<16x128xf32> to vector<16x32xf32>
    %291 = vector.extract_strided_slice %281 {offsets = [0, 32], sizes = [16, 32], strides = [1, 1]} : vector<16x128xf32> to vector<16x32xf32>
    %292 = arith.addf %290, %291 : vector<16x32xf32>
    %293 = arith.negf %292 : vector<16x32xf32>
    %294 = math.exp %293 : vector<16x32xf32>
    %cst_67 = arith.constant 1.000000e+00 : f32
    %295 = vector.broadcast %cst_67 : f32 to vector<16x32xf32>
    %296 = arith.addf %295, %294 : vector<16x32xf32>
    %297 = arith.divf %295, %296 : vector<16x32xf32>
    %298 = vector.extract_strided_slice %278 {offsets = [0, 64], sizes = [16, 32], strides = [1, 1]} : vector<16x128xf32> to vector<16x32xf32>
    %299 = vector.extract_strided_slice %281 {offsets = [0, 64], sizes = [16, 32], strides = [1, 1]} : vector<16x128xf32> to vector<16x32xf32>
    %300 = arith.mulf %289, %299 : vector<16x32xf32>
    %301 = arith.addf %298, %300 : vector<16x32xf32>
    %302 = math.tanh %301 : vector<16x32xf32>
    %cst_68 = arith.constant 1.000000e+00 : f32
    %303 = vector.broadcast %cst_68 : f32 to vector<16x32xf32>
    %304 = arith.subf %303, %297 : vector<16x32xf32>
    %305 = arith.mulf %304, %302 : vector<16x32xf32>
    %306 = arith.mulf %297, %276 : vector<16x32xf32>
    %307 = arith.addf %305, %306 : vector<16x32xf32>
    %c0_69 = arith.constant 0 : index
    %c224 = arith.constant 224 : index
    %308 = vector.load %arg12[%c0_69, %c224] : memref<16x256xf32, #tpu.memory_space<vmem>>, vector<16x32xf32>
    tpu.vector_store %arg12[%c0_69, %c224], %307 {strides = array<i32>} : memref<16x256xf32, #tpu.memory_space<vmem>>, vector<16x32xf32>,
    %c0_70 = arith.constant 0 : index
    %c0_71 = arith.constant 0 : index
    %309 = vector.load %arg12[%c0_70, %c0_71] : memref<16x256xf32, #tpu.memory_space<vmem>>, vector<16x256xf32>
    %c0_72 = arith.constant 0 : index
    %c0_73 = arith.constant 0 : index
    %310 = vector.load %arg9[%c0_72, %c0_73] : memref<256x128xf32, #tpu.memory_space<vmem>>, vector<256x128xf32>
    %cst_74 = arith.constant dense<0.000000e+00> : vector<16x128xf32>
    %311 = tpu.matmul %309, %310, %cst_74 {dimension_numbers = #tpu.dot_dimension_numbers<[1], [0], [0], [1], [0, 0, 1, 1], [], []>} : vector<16x256xf32>, vector<256x128xf32>, vector<16x128xf32> -> vector<16x128xf32>
    %c0_75 = arith.constant 0 : index
    %c0_76 = arith.constant 0 : index
    %312 = vector.load %arg10[%c0_75, %c0_76] : memref<1x128xf32, #tpu.memory_space<vmem>>, vector<1x128xf32>
    %313 = vector.broadcast %312 : vector<1x128xf32> to vector<16x128xf32>
    %314 = arith.addf %311, %313 : vector<16x128xf32>
    %c0_77 = arith.constant 0 : index
    %c0_78 = arith.constant 0 : index
    %315 = vector.load %arg11[%c0_77, %c0_78] : memref<16x128xf32, #tpu.memory_space<vmem>>, vector<16x128xf32>
    tpu.vector_store %arg11[%c0_77, %c0_78], %314 {strides = array<i32>} : memref<16x128xf32, #tpu.memory_space<vmem>>, vector<16x128xf32>,
    return
  }
}

</mosaic_0001>

<llo_original>
// kernel: gatgru_forward.1
$region0: #{gatgru_forward.1}
  #allocation0 [shape = 'u32[]', space=smem, size = 0x4, offset = 0x4, fixed_abs, tag = 'smem constant byte address 0x4 - core index']
  #allocation1 [shape = 'u32[144,128]{1,0:T(1,128)}', space=vmem, size = 0x12000, scoped, tag = 'internal scratch']
  #allocation2 [shape = 'f32[16,256]{1,0:T(8,128)}', space=vmem, size = 0x4000, scoped, tag = 'scratch operand']
  %s0 = inlined_call_operand.vmem [shape: f32[16,32], index: 0, kind: input, shape index: {}]
  %s1 = inlined_call_operand.vmem [shape: f32[32,96], index: 1, kind: input, shape index: {}]
  %s2 = inlined_call_operand.vmem [shape: f32[96,6], index: 2, kind: input, shape index: {}]
  %s3 = inlined_call_operand.vmem [shape: f32[16,16], index: 3, kind: input, shape index: {}]
  %s4 = inlined_call_operand.vmem [shape: f32[1,32], index: 4, kind: input, shape index: {}]
  %s5 = inlined_call_operand.vmem [shape: f32[32,1024], index: 5, kind: input, shape index: {}]
  %s6 = inlined_call_operand.vmem [shape: f32[1,1024], index: 6, kind: input, shape index: {}]
  %s7 = inlined_call_operand.vmem [shape: f32[32,128], index: 7, kind: input, shape index: {}]
  %s8 = inlined_call_operand.vmem [shape: f32[1,128], index: 8, kind: input, shape index: {}]
  %s9 = inlined_call_operand.vmem [shape: f32[256,128], index: 9, kind: input, shape index: {}]
  %s10 = inlined_call_operand.vmem [shape: f32[1,128], index: 10, kind: input, shape index: {}]
  %s11 = inlined_call_operand.vmem [shape: f32[16,128], index: 11, kind: output, shape index: {}]
  %s12 = sld [smem:[#allocation0]]
  $region54: #{gatgru_forward.1} parent=0
    _
  %s14 = ssub.s32 1, %s12
  %s15 = scalar_select 0, %s14, %s12
  // Predicated region
  $region2: #{gatgru_forward.1} parent=0 // pred_check
    _
  $region3: #{gatgru_forward.1} parent=0 // pred_check_branch
    %17 = sbr.rel (0) target = $region5
  $region4: #{gatgru_forward.1} parent=0 // pred_region
    _
  $region5: #{gatgru_forward.1} parent=0 // pred_fallthru
    _
  // Predicated region
  $region6: #{gatgru_forward.1} parent=0 // pred_check
    _
  $region7: #{gatgru_forward.1} parent=0 // pred_check_branch
    %19 = sbr.rel (0) target = $region9
  $region8: #{gatgru_forward.1} parent=0 // pred_region
    _
  $region9: #{gatgru_forward.1} parent=0 // pred_fallthru
    _
  // Predicated region
  $region10: #{gatgru_forward.1} parent=0 // pred_check
    _
  $region11: #{gatgru_forward.1} parent=0 // pred_check_branch
    %21 = sbr.rel (0) target = $region13
  $region12: #{gatgru_forward.1} parent=0 // pred_region
    _
  $region13: #{gatgru_forward.1} parent=0 // pred_fallthru
    _
  // Predicated region
  $region14: #{gatgru_forward.1} parent=0 // pred_check
    _
  $region15: #{gatgru_forward.1} parent=0 // pred_check_branch
    %23 = sbr.rel (0) target = $region17
  $region16: #{gatgru_forward.1} parent=0 // pred_region
    _
  $region17: #{gatgru_forward.1} parent=0 // pred_fallthru
    _
  // Predicated region
  $region18: #{gatgru_forward.1} parent=0 // pred_check
    _
  $region19: #{gatgru_forward.1} parent=0 // pred_check_branch
    %25 = sbr.rel (0) target = $region21
  $region20: #{gatgru_forward.1} parent=0 // pred_region
    _
  $region21: #{gatgru_forward.1} parent=0 // pred_fallthru
    _
  // Predicated region
  $region22: #{gatgru_forward.1} parent=0 // pred_check
    _
  $region23: #{gatgru_forward.1} parent=0 // pred_check_branch
    %27 = sbr.rel (0) target = $region25
  $region24: #{gatgru_forward.1} parent=0 // pred_region
    _
  $region25: #{gatgru_forward.1} parent=0 // pred_fallthru
    _
  // Predicated region
  $region26: #{gatgru_forward.1} parent=0 // pred_check
    _
  $region27: #{gatgru_forward.1} parent=0 // pred_check_branch
    %29 = sbr.rel (0) target = $region29
  $region28: #{gatgru_forward.1} parent=0 // pred_region
    _
  $region29: #{gatgru_forward.1} parent=0 // pred_fallthru
    _
  // Predicated region
  $region30: #{gatgru_forward.1} parent=0 // pred_check
    _
  $region31: #{gatgru_forward.1} parent=0 // pred_check_branch
    %31 = sbr.rel (0) target = $region33
  $region32: #{gatgru_forward.1} parent=0 // pred_region
    _
  $region33: #{gatgru_forward.1} parent=0 // pred_fallthru
    _
  // Predicated region
  $region34: #{gatgru_forward.1} parent=0 // pred_check
    _
  $region35: #{gatgru_forward.1} parent=0 // pred_check_branch
    %33 = sbr.rel (0) target = $region37
  $region36: #{gatgru_forward.1} parent=0 // pred_region
    _
  $region37: #{gatgru_forward.1} parent=0 // pred_fallthru
    _
  // Predicated region
  $region38: #{gatgru_forward.1} parent=0 // pred_check
    _
  $region39: #{gatgru_forward.1} parent=0 // pred_check_branch
    %35 = sbr.rel (0) target = $region41
  $region40: #{gatgru_forward.1} parent=0 // pred_region
    _
  $region41: #{gatgru_forward.1} parent=0 // pred_fallthru
    _
  // Predicated region
  $region42: #{gatgru_forward.1} parent=0 // pred_check
    _
  $region43: #{gatgru_forward.1} parent=0 // pred_check_branch
    %37 = sbr.rel (0) target = $region45
  $region44: #{gatgru_forward.1} parent=0 // pred_region
    _
  $region45: #{gatgru_forward.1} parent=0 // pred_fallthru
    _
  %v38 = vld [vmem:[%s0] sm:$0xff]
  %v39 = vld [vmem:[%s0 + $0x8] sm:$0xff]
  %v40 = vld [vmem:[%s1] sm:$0xff]
  %v41 = vld [vmem:[%s1 + $0x8] sm:$0xff]
  %v42 = vld [vmem:[%s1 + $0x10] sm:$0xff]
  %v43 = vld [vmem:[%s1 + $0x18] sm:$0xff]
  %vm44 = vcmask 261120
  %v46 = vsel %vm44, %v38, 0
  %v49 = vsel %vm44, %v39, 0
  %51 = vmatprep.subr.mxu0 0.0
  %52 = vmatpush1.msra.mxu0 %v40
  %53 = vmatprep.subr.mxu0 0.0
  %54 = vmatpush1.msra.mxu0 %v41
  %55 = vmatprep.subr.mxu0 0.0
  %56 = vmatpush1.msra.mxu0 %v42
  %57 = vmatprep.subr.mxu0 0.0
  %58 = vmatpush1.msra.mxu0 %v43
  %59 = vmatprep.subr.mxu0 0.0
  %60 = vmatpush1.msra.mxu0 0.0
  %61 = vmatprep.subr.mxu0 0.0
  %62 = vmatpush1.msra.mxu0 0.0
  %63 = vmatprep.subr.mxu0 0.0
  %64 = vmatpush1.msra.mxu0 0.0
  %65 = vmatprep.subr.mxu0 0.0
  %66 = vmatpush1.msra.mxu0 0.0
  %67 = vmatprep.subr.mxu0 0.0
  %68 = vmatpush1.msra.mxu0 0.0
  %69 = vmatprep.subr.mxu0 0.0
  %70 = vmatpush1.msra.mxu0 0.0
  %71 = vmatprep.subr.mxu0 0.0
  %72 = vmatpush1.msra.mxu0 0.0
  %73 = vmatprep.subr.mxu0 0.0
  %74 = vmatpush1.msra.mxu0 0.0
  %75 = vmatprep.subr.mxu0 0.0
  %76 = vmatpush1.msra.mxu0 0.0
  %77 = vmatprep.subr.mxu0 0.0
  %78 = vmatpush1.msra.mxu0 0.0
  %79 = vmatprep.subr.mxu0 0.0
  %80 = vmatpush1.msra.mxu0 0.0
  %81 = vmatprep.subr.mxu0 0.0
  %82 = vmatpush1.msra.mxu0 0.0
  %83 = vmatprep.subr.mxu0 0.0
  %84 = vmatpush1.msra.mxu0 0.0
  %85 = vmatprep.subr.mxu0 0.0
  %86 = vmatpush1.msra.mxu0 0.0
  %87 = vmatprep.subr.mxu0 0.0
  %88 = vmatpush1.msra.mxu0 0.0
  %89 = vmatprep.subr.mxu0 0.0
  %90 = vmatpush1.msra.mxu0 0.0
  %91 = vmatprep.subr.mxu0 0.0
  %92 = vmatpush1.msra.mxu0 0.0
  %93 = vmatprep.subr.mxu0 0.0
  %94 = vmatpush1.msra.mxu0 0.0
  %95 = vmatprep.subr.mxu0 0.0
  %96 = vmatpush1.msra.mxu0 0.0
  %97 = vmatprep.subr.mxu0 0.0
  %98 = vmatpush1.msra.mxu0 0.0
  %99 = vmatprep.subr.mxu0 0.0
  %100 = vmatpush1.msra.mxu0 0.0
  %101 = vmatprep.subr.mxu0 0.0
  %102 = vmatpush1.msra.mxu0 0.0
  %103 = vmatprep.subr.mxu0 0.0
  %104 = vmatpush1.msra.mxu0 0.0
  %105 = vmatprep.subr.mxu0 0.0
  %106 = vmatpush1.msra.mxu0 0.0
  %107 = vmatprep.subr.mxu0 0.0
  %108 = vmatpush1.msra.mxu0 0.0
  %109 = vmatprep.subr.mxu0 0.0
  %110 = vmatpush1.msra.mxu0 0.0
  %111 = vmatprep.subr.mxu0 0.0
  %112 = vmatpush1.msra.mxu0 0.0
  %113 = vmatprep.subr.mxu0 0.0
  %114 = vmatpush1.msra.mxu0 0.0
  %115 = vmatprep.mubr.f32.mxu0 0.0
  %116 = vmatmul.mubr.f32.gmra.mrb[0].mxu0 %v46
  %v117 = vpop.f32.mrb[0].mxu0
  %v118 = vadd.f32 0.0, %v117
  %v119 = vpop.f32.mrb[0].mxu0
  %120 = vmatprep.mubr.f32.mxu0 0.0
  %121 = vmatmul.mubr.f32.gmra.mrb[0].mxu0 %v49
  %v122 = vpop.f32.mrb[0].mxu0
  %v123 = vadd.f32 0.0, %v122
  %v124 = vpop.f32.mrb[0].mxu0
  %125 = vdwg.mxu0
  %v126 = vld [vmem:[%s2] sm:$0xff]
  %v127 = vld [vmem:[%s2 + $0x8] sm:$0xff]
  %v128 = vld [vmem:[%s2 + $0x10] sm:$0xff]
  %v129 = vld [vmem:[%s2 + $0x18] sm:$0xff]
  %v130 = vld [vmem:[%s2 + $0x20] sm:$0xff]
  %v131 = vld [vmem:[%s2 + $0x28] sm:$0xff]
  %v132 = vld [vmem:[%s2 + $0x30] sm:$0xff]
  %v133 = vld [vmem:[%s2 + $0x38] sm:$0xff]
  %v134 = vld [vmem:[%s2 + $0x40] sm:$0xff]
  %v135 = vld [vmem:[%s2 + $0x48] sm:$0xff]
  %v136 = vld [vmem:[%s2 + $0x50] sm:$0xff]
  %v137 = vld [vmem:[%s2 + $0x58] sm:$0xff]
  %vm138 = vcmask 785408
  %v140 = vsel %vm138, %v118, 0
  %v143 = vsel %vm138, %v123, 0
  %145 = vmatprep.subr.mxu0 0.0
  %146 = vmatpush1.msra.mxu0 %v126
  %147 = vmatprep.subr.mxu0 0.0
  %148 = vmatpush1.msra.mxu0 %v127
  %149 = vmatprep.subr.mxu0 0.0
  %150 = vmatpush1.msra.mxu0 %v128
  %151 = vmatprep.subr.mxu0 0.0
  %152 = vmatpush1.msra.mxu0 %v129
  %153 = vmatprep.subr.mxu0 0.0
  %154 = vmatpush1.msra.mxu0 %v130
  %155 = vmatprep.subr.mxu0 0.0
  %156 = vmatpush1.msra.mxu0 %v131
  %157 = vmatprep.subr.mxu0 0.0
  %158 = vmatpush1.msra.mxu0 %v132
  %159 = vmatprep.subr.mxu0 0.0
  %160 = vmatpush1.msra.mxu0 %v133
  %161 = vmatprep.subr.mxu0 0.0
  %162 = vmatpush1.msra.mxu0 %v134
  %163 = vmatprep.subr.mxu0 0.0
  %164 = vmatpush1.msra.mxu0 %v135
  %165 = vmatprep.subr.mxu0 0.0
  %166 = vmatpush1.msra.mxu0 %v136
  %167 = vmatprep.subr.mxu0 0.0
  %168 = vmatpush1.msra.mxu0 %v137
  %169 = vmatprep.subr.mxu0 0.0
  %170 = vmatpush1.msra.mxu0 0.0
  %171 = vmatprep.subr.mxu0 0.0
  %172 = vmatpush1.msra.mxu0 0.0
  %173 = vmatprep.subr.mxu0 0.0
  %174 = vmatpush1.msra.mxu0 0.0
  %175 = vmatprep.subr.mxu0 0.0
  %176 = vmatpush1.msra.mxu0 0.0
  %177 = vmatprep.subr.mxu0 0.0
  %178 = vmatpush1.msra.mxu0 0.0
  %179 = vmatprep.subr.mxu0 0.0
  %180 = vmatpush1.msra.mxu0 0.0
  %181 = vmatprep.subr.mxu0 0.0
  %182 = vmatpush1.msra.mxu0 0.0
  %183 = vmatprep.subr.mxu0 0.0
  %184 = vmatpush1.msra.mxu0 0.0
  %185 = vmatprep.subr.mxu0 0.0
  %186 = vmatpush1.msra.mxu0 0.0
  %187 = vmatprep.subr.mxu0 0.0
  %188 = vmatpush1.msra.mxu0 0.0
  %189 = vmatprep.subr.mxu0 0.0
  %190 = vmatpush1.msra.mxu0 0.0
  %191 = vmatprep.subr.mxu0 0.0
  %192 = vmatpush1.msra.mxu0 0.0
  %193 = vmatprep.subr.mxu0 0.0
  %194 = vmatpush1.msra.mxu0 0.0
  %195 = vmatprep.subr.mxu0 0.0
  %196 = vmatpush1.msra.mxu0 0.0
  %197 = vmatprep.subr.mxu0 0.0
  %198 = vmatpush1.msra.mxu0 0.0
  %199 = vmatprep.subr.mxu0 0.0
  %200 = vmatpush1.msra.mxu0 0.0
  %201 = vmatprep.subr.mxu0 0.0
  %202 = vmatpush1.msra.mxu0 0.0
  %203 = vmatprep.subr.mxu0 0.0
  %204 = vmatpush1.msra.mxu0 0.0
  %205 = vmatprep.subr.mxu0 0.0
  %206 = vmatpush1.msra.mxu0 0.0
  %207 = vmatprep.subr.mxu0 0.0
  %208 = vmatpush1.msra.mxu0 0.0
  %209 = vmatprep.mubr.f32.mxu0 0.0
  %210 = vmatmul.mubr.f32.gmra.mrb[0].mxu0 %v140
  %v211 = vpop.f32.mrb[0].mxu0
  %v212 = vadd.f32 0.0, %v211
  %v213 = vpop.f32.mrb[0].mxu0
  %214 = vmatprep.mubr.f32.mxu0 0.0
  %215 = vmatmul.mubr.f32.gmra.mrb[0].mxu0 %v143
  %v216 = vpop.f32.mrb[0].mxu0
  %v217 = vadd.f32 0.0, %v216
  %v218 = vpop.f32.mrb[0].mxu0
  %219 = vdwg.mxu0
  %220 = vxpose.xlu0.b32.start [1/16] %v212, 128
  %221 = vxpose.xlu0.b32.cont [2/16] %v217, 128
  %222 = vxpose.xlu0.b32.cont [3/16] 0.0, 128
  %223 = vxpose.xlu0.b32.cont [4/16] 0.0, 128
  %224 = vxpose.xlu0.b32.cont [5/16] 0.0, 128
  %225 = vxpose.xlu0.b32.cont [6/16] 0.0, 128
  %226 = vxpose.xlu0.b32.cont [7/16] 0.0, 128
  %227 = vxpose.xlu0.b32.cont [8/16] 0.0, 128
  %228 = vxpose.xlu0.b32.cont [9/16] 0.0, 128
  %229 = vxpose.xlu0.b32.cont [10/16] 0.0, 128
  %230 = vxpose.xlu0.b32.cont [11/16] 0.0, 128
  %231 = vxpose.xlu0.b32.cont [12/16] 0.0, 128
  %232 = vxpose.xlu0.b32.cont [13/16] 0.0, 128
  %233 = vxpose.xlu0.b32.cont [14/16] 0.0, 128
  %234 = vxpose.xlu0.b32.cont [15/16] 0.0, 128
  %235 = vxpose.xlu0.b32.end [16/16] 0.0, 128
  %v236 = vpop.trf.xlu0
  %v237 = vpop.trf.xlu0
  %v238 = vpop.trf.xlu0
  %v239 = vpop.trf.xlu0
  %v240 = vpop.trf.xlu0
  %v241 = vpop.trf.xlu0
  %v242 = vpop.trf.xlu0
  %v243 = vpop.trf.xlu0
  %v244 = vpop.trf.xlu0
  %v245 = vpop.trf.xlu0
  %v246 = vpop.trf.xlu0
  %v247 = vpop.trf.xlu0
  %v248 = vpop.trf.xlu0
  %v249 = vpop.trf.xlu0
  %v250 = vpop.trf.xlu0
  %v251 = vpop.trf.xlu0
  %v252 = vlaneseq
  %v253 = vshrl.u32 %v252, 7
  %v254 = vsub.s32 0, %v253
  %v255 = vrot.slane %v236, %v254
  %257 = vbcast.lane.b32.xlu0 %v255, 256
  %v258 = vpop.permute.xlu0 %257
  %s260 = sor.u32 256, 8
  %261 = vbcast.lane.b32.xlu0 %v255, %s260
  %v262 = vpop.permute.xlu0 %261
  %v263 = vlaneseq
  %v264 = vshrl.u32 %v263, 7
  %v265 = vsub.s32 1, %v264
  %v266 = vrot.slane %v236, %v265
  %268 = vbcast.lane.b32.xlu0 %v266, 256
  %v269 = vpop.permute.xlu0 %268
  %s271 = sor.u32 256, 8
  %272 = vbcast.lane.b32.xlu0 %v266, %s271
  %v273 = vpop.permute.xlu0 %272
  %v274 = vlaneseq
  %v275 = vshrl.u32 %v274, 7
  %v276 = vsub.s32 2, %v275
  %v277 = vrot.slane %v236, %v276
  %279 = vbcast.lane.b32.xlu0 %v277, 256
  %v280 = vpop.permute.xlu0 %279
  %s282 = sor.u32 256, 8
  %283 = vbcast.lane.b32.xlu0 %v277, %s282
  %v284 = vpop.permute.xlu0 %283
  %v286 = vcombine.high %v236, %v236
  %v288 = vunpack.c.l.s4 1966171168
  %v289 = vunpack.c.0.s8 %v288
  %v290 = vlaneseq
  %v291 = vshrl.u32 %v290, 7
  %v292 = vsub.s32 %v289, %v291
  %v293 = vrot.slane %v236, %v292
  %v295 = vunpack.c.l.s4 1966171168
  %v296 = vunpack.c.0.s8 %v295
  %v297 = vlaneseq
  %v298 = vshrl.u32 %v297, 7
  %v299 = vsub.s32 %v296, %v298
  %v300 = vrot.slane %v286, %v299
  %v301 = vcombine.high %v293, %v293
  %v302 = vcombine.high %v300, %v300
  %v304 = vunpack.c.l.s4 1966171168
  %v305 = vunpack.c.0.s8 %v304
  %v306 = vlaneseq
  %v307 = vshrl.u32 %v306, 7
  %v308 = vsub.s32 %v305, %v307
  %v309 = vrot.slane %v300, %v308
  %v311 = vunpack.c.l.s4 1966171168
  %v312 = vunpack.c.0.s8 %v311
  %v313 = vlaneseq
  %v314 = vshrl.u32 %v313, 7
  %v315 = vsub.s32 %v312, %v314
  %v316 = vrot.slane %v301, %v315
  %v318 = vunpack.c.l.s4 1966171168
  %v319 = vunpack.c.0.s8 %v318
  %v320 = vlaneseq
  %v321 = vshrl.u32 %v320, 7
  %v322 = vsub.s32 %v319, %v321
  %v323 = vrot.slane %v302, %v322
  %v324 = vcombine.high %v316, %v316
  %v325 = vlaneseq
  %v326 = vshrl.u32 %v325, 7
  %v327 = vsub.s32 0, %v326
  %v328 = vrot.slane %v324, %v327
  %v329 = vlaneseq
  %v330 = vshrl.u32 %v329, 7
  %v331 = vsub.s32 0, %v330
  %v332 = vrot.slane %v309, %v331
  %v333 = vlaneseq
  %v334 = vshrl.u32 %v333, 7
  %v335 = vsub.s32 0, %v334
  %v336 = vrot.slane %v323, %v335
  %v340 = vadd.f32 %v258, %v328
  %v341 = vadd.f32 %v262, %v328
  %v342 = vadd.f32 %v269, %v332
  %v343 = vadd.f32 %v273, %v332
  %v344 = vadd.f32 %v280, %v336
  %v345 = vadd.f32 %v284, %v336
  %vm346 = vcmp.gt.f32.partialorder %v340, 0.0
  %vm347 = vcmp.gt.f32.partialorder %v341, 0.0
  %vm348 = vcmp.gt.f32.partialorder %v342, 0.0
  %vm349 = vcmp.gt.f32.partialorder %v343, 0.0
  %vm350 = vcmp.gt.f32.partialorder %v344, 0.0
  %vm351 = vcmp.gt.f32.partialorder %v345, 0.0
  %v352 = vmul.f32 %v340, 0.2
  %v353 = vmul.f32 %v341, 0.2
  %v354 = vmul.f32 %v342, 0.2
  %v355 = vmul.f32 %v343, 0.2
  %v356 = vmul.f32 %v344, 0.2
  %v357 = vmul.f32 %v345, 0.2
  %v358 = vsel %vm346, %v340, %v352
  %v359 = vsel %vm347, %v341, %v353
  %v360 = vsel %vm348, %v342, %v354
  %v361 = vsel %vm349, %v343, %v355
  %v362 = vsel %vm350, %v344, %v356
  %v363 = vsel %vm351, %v345, %v357
  %v364 = vld [vmem:[%s3] sm:$0xff]
  %v365 = vld [vmem:[%s3 + $0x8] sm:$0xff]
  %v366 = vadd.f32 %v358, %v364
  %v367 = vadd.f32 %v359, %v365
  %v368 = vadd.f32 %v360, %v364
  %v369 = vadd.f32 %v361, %v365
  %v370 = vadd.f32 %v362, %v364
  %v371 = vadd.f32 %v363, %v365
  %vm372 = vcmask 130048
  %v373 = vsel %vm372, %v366, -inf
  %374 = vmax.xlane.f32.xlu0 %v373
  %v375 = vpop.xlane.xlu0 %374
  %v376 = vsel %vm372, %v367, -inf
  %377 = vmax.xlane.f32.xlu0 %v376
  %v378 = vpop.xlane.xlu0 %377
  %v379 = vsel %vm372, %v368, -inf
  %380 = vmax.xlane.f32.xlu0 %v379
  %v381 = vpop.xlane.xlu0 %380
  %v382 = vsel %vm372, %v369, -inf
  %383 = vmax.xlane.f32.xlu0 %v382
  %v384 = vpop.xlane.xlu0 %383
  %v385 = vsel %vm372, %v370, -inf
  %386 = vmax.xlane.f32.xlu0 %v385
  %v387 = vpop.xlane.xlu0 %386
  %v388 = vsel %vm372, %v371, -inf
  %389 = vmax.xlane.f32.xlu0 %v388
  %v390 = vpop.xlane.xlu0 %389
  %v391 = vsub.f32 %v366, %v375
  %v392 = vsub.f32 %v367, %v378
  %v393 = vsub.f32 %v368, %v381
  %v394 = vsub.f32 %v369, %v384
  %v395 = vsub.f32 %v370, %v387
  %v396 = vsub.f32 %v371, %v390
  %v397 = vmul.f32 %v391, 1.442695
  %v398 = vpow.pop %v397
  %v399 = vmul.f32 %v392, 1.442695
  %v400 = vpow.pop %v399
  %v401 = vmul.f32 %v393, 1.442695
  %v402 = vpow.pop %v401
  %v403 = vmul.f32 %v394, 1.442695
  %v404 = vpow.pop %v403
  %v405 = vmul.f32 %v395, 1.442695
  %v406 = vpow.pop %v405
  %v407 = vmul.f32 %v396, 1.442695
  %v408 = vpow.pop %v407
  %v409 = vsel %vm372, %v398, 0.0
  %410 = vadd.xlane.f32.xlu0 %v409
  %v411 = vpop.xlane.xlu0 %410
  %v412 = vsel %vm372, %v400, 0.0
  %413 = vadd.xlane.f32.xlu0 %v412
  %v414 = vpop.xlane.xlu0 %413
  %v415 = vsel %vm372, %v402, 0.0
  %416 = vadd.xlane.f32.xlu0 %v415
  %v417 = vpop.xlane.xlu0 %416
  %v418 = vsel %vm372, %v404, 0.0
  %419 = vadd.xlane.f32.xlu0 %v418
  %v420 = vpop.xlane.xlu0 %419
  %v421 = vsel %vm372, %v406, 0.0
  %422 = vadd.xlane.f32.xlu0 %v421
  %v423 = vpop.xlane.xlu0 %422
  %v424 = vsel %vm372, %v408, 0.0
  %425 = vadd.xlane.f32.xlu0 %v424
  %v426 = vpop.xlane.xlu0 %425
  %v427 = vrcp.pop %v411
  %v428 = vrcp.pop %v414
  %v429 = vrcp.pop %v417
  %v430 = vrcp.pop %v420
  %v431 = vrcp.pop %v423
  %v432 = vrcp.pop %v426
  %v433 = vmul.f32 %v398, %v427
  %v434 = vmul.f32 %v400, %v428
  %v435 = vmul.f32 %v402, %v429
  %v436 = vmul.f32 %v404, %v430
  %v437 = vmul.f32 %v406, %v431
  %v438 = vmul.f32 %v408, %v432
  %439 = vrot.lane.b32.xlu0 %v118, 96
  %v440 = vpop.permute.xlu0 %439
  %441 = vrot.lane.b32.xlu0 %v123, 96
  %v442 = vpop.permute.xlu0 %441
  %v446 = vsel %vm372, %v435, 0
  %v449 = vsel %vm372, %v436, 0
  %451 = vmatprep.subr.mxu0 0.0
  %452 = vmatpush1.msra.mxu0 %v440
  %453 = vmatprep.subr.mxu0 0.0
  %454 = vmatpush1.msra.mxu0 %v442
  %455 = vmatprep.subr.mxu0 0.0
  %456 = vmatpush1.msra.mxu0 0.0
  %457 = vmatprep.subr.mxu0 0.0
  %458 = vmatpush1.msra.mxu0 0.0
  %459 = vmatprep.subr.mxu0 0.0
  %460 = vmatpush1.msra.mxu0 0.0
  %461 = vmatprep.subr.mxu0 0.0
  %462 = vmatpush1.msra.mxu0 0.0
  %463 = vmatprep.subr.mxu0 0.0
  %464 = vmatpush1.msra.mxu0 0.0
  %465 = vmatprep.subr.mxu0 0.0
  %466 = vmatpush1.msra.mxu0 0.0
  %467 = vmatprep.subr.mxu0 0.0
  %468 = vmatpush1.msra.mxu0 0.0
  %469 = vmatprep.subr.mxu0 0.0
  %470 = vmatpush1.msra.mxu0 0.0
  %471 = vmatprep.subr.mxu0 0.0
  %472 = vmatpush1.msra.mxu0 0.0
  %473 = vmatprep.subr.mxu0 0.0
  %474 = vmatpush1.msra.mxu0 0.0
  %475 = vmatprep.subr.mxu0 0.0
  %476 = vmatpush1.msra.mxu0 0.0
  %477 = vmatprep.subr.mxu0 0.0
  %478 = vmatpush1.msra.mxu0 0.0
  %479 = vmatprep.subr.mxu0 0.0
  %480 = vmatpush1.msra.mxu0 0.0
  %481 = vmatprep.subr.mxu0 0.0
  %482 = vmatpush1.msra.mxu0 0.0
  %483 = vmatprep.subr.mxu0 0.0
  %484 = vmatpush1.msra.mxu0 0.0
  %485 = vmatprep.subr.mxu0 0.0
  %486 = vmatpush1.msra.mxu0 0.0
  %487 = vmatprep.subr.mxu0 0.0
  %488 = vmatpush1.msra.mxu0 0.0
  %489 = vmatprep.subr.mxu0 0.0
  %490 = vmatpush1.msra.mxu0 0.0
  %491 = vmatprep.subr.mxu0 0.0
  %492 = vmatpush1.msra.mxu0 0.0
  %493 = vmatprep.subr.mxu0 0.0
  %494 = vmatpush1.msra.mxu0 0.0
  %495 = vmatprep.subr.mxu0 0.0
  %496 = vmatpush1.msra.mxu0 0.0
  %497 = vmatprep.subr.mxu0 0.0
  %498 = vmatpush1.msra.mxu0 0.0
  %499 = vmatprep.subr.mxu0 0.0
  %500 = vmatpush1.msra.mxu0 0.0
  %501 = vmatprep.subr.mxu0 0.0
  %502 = vmatpush1.msra.mxu0 0.0
  %503 = vmatprep.subr.mxu0 0.0
  %504 = vmatpush1.msra.mxu0 0.0
  %505 = vmatprep.subr.mxu0 0.0
  %506 = vmatpush1.msra.mxu0 0.0
  %507 = vmatprep.subr.mxu0 0.0
  %508 = vmatpush1.msra.mxu0 0.0
  %509 = vmatprep.subr.mxu0 0.0
  %510 = vmatpush1.msra.mxu0 0.0
  %511 = vmatprep.subr.mxu0 0.0
  %512 = vmatpush1.msra.mxu0 0.0
  %513 = vmatprep.subr.mxu0 0.0
  %514 = vmatpush1.msra.mxu0 0.0
  %515 = vmatprep.mubr.f32.mxu0 0.0
  %516 = vmatmul.mubr.f32.gmra.mrb[0].mxu0 %v446
  %v517 = vpop.f32.mrb[0].mxu0
  %v518 = vadd.f32 0.0, %v517
  %v519 = vpop.f32.mrb[0].mxu0
  %520 = vmatprep.mubr.f32.mxu0 0.0
  %521 = vmatmul.mubr.f32.gmra.mrb[0].mxu0 %v449
  %v522 = vpop.f32.mrb[0].mxu0
  %v523 = vadd.f32 0.0, %v522
  %v524 = vpop.f32.mrb[0].mxu0
  %525 = vdwg.mxu0
  %v527 = vsel %vm372, %v433, 0
  %v530 = vsel %vm372, %v434, 0
  %532 = vmatprep.subr.mxu0 0.0
  %533 = vmatpush1.msra.mxu0 %v118
  %534 = vmatprep.subr.mxu0 0.0
  %535 = vmatpush1.msra.mxu0 %v123
  %536 = vmatprep.subr.mxu0 0.0
  %537 = vmatpush1.msra.mxu0 0.0
  %538 = vmatprep.subr.mxu0 0.0
  %539 = vmatpush1.msra.mxu0 0.0
  %540 = vmatprep.subr.mxu0 0.0
  %541 = vmatpush1.msra.mxu0 0.0
  %542 = vmatprep.subr.mxu0 0.0
  %543 = vmatpush1.msra.mxu0 0.0
  %544 = vmatprep.subr.mxu0 0.0
  %545 = vmatpush1.msra.mxu0 0.0
  %546 = vmatprep.subr.mxu0 0.0
  %547 = vmatpush1.msra.mxu0 0.0
  %548 = vmatprep.subr.mxu0 0.0
  %549 = vmatpush1.msra.mxu0 0.0
  %550 = vmatprep.subr.mxu0 0.0
  %551 = vmatpush1.msra.mxu0 0.0
  %552 = vmatprep.subr.mxu0 0.0
  %553 = vmatpush1.msra.mxu0 0.0
  %554 = vmatprep.subr.mxu0 0.0
  %555 = vmatpush1.msra.mxu0 0.0
  %556 = vmatprep.subr.mxu0 0.0
  %557 = vmatpush1.msra.mxu0 0.0
  %558 = vmatprep.subr.mxu0 0.0
  %559 = vmatpush1.msra.mxu0 0.0
  %560 = vmatprep.subr.mxu0 0.0
  %561 = vmatpush1.msra.mxu0 0.0
  %562 = vmatprep.subr.mxu0 0.0
  %563 = vmatpush1.msra.mxu0 0.0
  %564 = vmatprep.subr.mxu0 0.0
  %565 = vmatpush1.msra.mxu0 0.0
  %566 = vmatprep.subr.mxu0 0.0
  %567 = vmatpush1.msra.mxu0 0.0
  %568 = vmatprep.subr.mxu0 0.0
  %569 = vmatpush1.msra.mxu0 0.0
  %570 = vmatprep.subr.mxu0 0.0
  %571 = vmatpush1.msra.mxu0 0.0
  %572 = vmatprep.subr.mxu0 0.0
  %573 = vmatpush1.msra.mxu0 0.0
  %574 = vmatprep.subr.mxu0 0.0
  %575 = vmatpush1.msra.mxu0 0.0
  %576 = vmatprep.subr.mxu0 0.0
  %577 = vmatpush1.msra.mxu0 0.0
  %578 = vmatprep.subr.mxu0 0.0
  %579 = vmatpush1.msra.mxu0 0.0
  %580 = vmatprep.subr.mxu0 0.0
  %581 = vmatpush1.msra.mxu0 0.0
  %582 = vmatprep.subr.mxu0 0.0
  %583 = vmatpush1.msra.mxu0 0.0
  %584 = vmatprep.subr.mxu0 0.0
  %585 = vmatpush1.msra.mxu0 0.0
  %586 = vmatprep.subr.mxu0 0.0
  %587 = vmatpush1.msra.mxu0 0.0
  %588 = vmatprep.subr.mxu0 0.0
  %589 = vmatpush1.msra.mxu0 0.0
  %590 = vmatprep.subr.mxu0 0.0
  %591 = vmatpush1.msra.mxu0 0.0
  %592 = vmatprep.subr.mxu0 0.0
  %593 = vmatpush1.msra.mxu0 0.0
  %594 = vmatprep.subr.mxu0 0.0
  %595 = vmatpush1.msra.mxu0 0.0
  %596 = vmatprep.mubr.f32.mxu0 0.0
  %597 = vmatmul.mubr.f32.gmra.mrb[0].mxu0 %v527
  %v598 = vpop.f32.mrb[0].mxu0
  %v599 = vadd.f32 %v518, %v598
  %v600 = vpop.f32.mrb[0].mxu0
  %601 = vmatprep.mubr.f32.mxu0 0.0
  %602 = vmatmul.mubr.f32.gmra.mrb[0].mxu0 %v530
  %v603 = vpop.f32.mrb[0].mxu0
  %v604 = vadd.f32 %v523, %v603
  %v605 = vpop.f32.mrb[0].mxu0
  %606 = vdwg.mxu0
  %607 = vrot.lane.b32.xlu0 %v118, 64
  %v608 = vpop.permute.xlu0 %607
  %609 = vrot.lane.b32.xlu0 %v123, 64
  %v610 = vpop.permute.xlu0 %609
  %v614 = vsel %vm372, %v437, 0
  %v617 = vsel %vm372, %v438, 0
  %619 = vmatprep.subr.mxu0 0.0
  %620 = vmatpush1.msra.mxu0 %v608
  %621 = vmatprep.subr.mxu0 0.0
  %622 = vmatpush1.msra.mxu0 %v610
  %623 = vmatprep.subr.mxu0 0.0
  %624 = vmatpush1.msra.mxu0 0.0
  %625 = vmatprep.subr.mxu0 0.0
  %626 = vmatpush1.msra.mxu0 0.0
  %627 = vmatprep.subr.mxu0 0.0
  %628 = vmatpush1.msra.mxu0 0.0
  %629 = vmatprep.subr.mxu0 0.0
  %630 = vmatpush1.msra.mxu0 0.0
  %631 = vmatprep.subr.mxu0 0.0
  %632 = vmatpush1.msra.mxu0 0.0
  %633 = vmatprep.subr.mxu0 0.0
  %634 = vmatpush1.msra.mxu0 0.0
  %635 = vmatprep.subr.mxu0 0.0
  %636 = vmatpush1.msra.mxu0 0.0
  %637 = vmatprep.subr.mxu0 0.0
  %638 = vmatpush1.msra.mxu0 0.0
  %639 = vmatprep.subr.mxu0 0.0
  %640 = vmatpush1.msra.mxu0 0.0
  %641 = vmatprep.subr.mxu0 0.0
  %642 = vmatpush1.msra.mxu0 0.0
  %643 = vmatprep.subr.mxu0 0.0
  %644 = vmatpush1.msra.mxu0 0.0
  %645 = vmatprep.subr.mxu0 0.0
  %646 = vmatpush1.msra.mxu0 0.0
  %647 = vmatprep.subr.mxu0 0.0
  %648 = vmatpush1.msra.mxu0 0.0
  %649 = vmatprep.subr.mxu0 0.0
  %650 = vmatpush1.msra.mxu0 0.0
  %651 = vmatprep.subr.mxu0 0.0
  %652 = vmatpush1.msra.mxu0 0.0
  %653 = vmatprep.subr.mxu0 0.0
  %654 = vmatpush1.msra.mxu0 0.0
  %655 = vmatprep.subr.mxu0 0.0
  %656 = vmatpush1.msra.mxu0 0.0
  %657 = vmatprep.subr.mxu0 0.0
  %658 = vmatpush1.msra.mxu0 0.0
  %659 = vmatprep.subr.mxu0 0.0
  %660 = vmatpush1.msra.mxu0 0.0
  %661 = vmatprep.subr.mxu0 0.0
  %662 = vmatpush1.msra.mxu0 0.0
  %663 = vmatprep.subr.mxu0 0.0
  %664 = vmatpush1.msra.mxu0 0.0
  %665 = vmatprep.subr.mxu0 0.0
  %666 = vmatpush1.msra.mxu0 0.0
  %667 = vmatprep.subr.mxu0 0.0
  %668 = vmatpush1.msra.mxu0 0.0
  %669 = vmatprep.subr.mxu0 0.0
  %670 = vmatpush1.msra.mxu0 0.0
  %671 = vmatprep.subr.mxu0 0.0
  %672 = vmatpush1.msra.mxu0 0.0
  %673 = vmatprep.subr.mxu0 0.0
  %674 = vmatpush1.msra.mxu0 0.0
  %675 = vmatprep.subr.mxu0 0.0
  %676 = vmatpush1.msra.mxu0 0.0
  %677 = vmatprep.subr.mxu0 0.0
  %678 = vmatpush1.msra.mxu0 0.0
  %679 = vmatprep.subr.mxu0 0.0
  %680 = vmatpush1.msra.mxu0 0.0
  %681 = vmatprep.subr.mxu0 0.0
  %682 = vmatpush1.msra.mxu0 0.0
  %683 = vmatprep.mubr.f32.mxu0 0.0
  %684 = vmatmul.mubr.f32.gmra.mrb[0].mxu0 %v614
  %v685 = vpop.f32.mrb[0].mxu0
  %v686 = vadd.f32 0.0, %v685
  %v687 = vpop.f32.mrb[0].mxu0
  %688 = vmatprep.mubr.f32.mxu0 0.0
  %689 = vmatmul.mubr.f32.gmra.mrb[0].mxu0 %v617
  %v690 = vpop.f32.mrb[0].mxu0
  %v691 = vadd.f32 0.0, %v690
  %v692 = vpop.f32.mrb[0].mxu0
  %693 = vdwg.mxu0
  %v694 = vadd.f32 %v599, %v686
  %v695 = vadd.f32 %v604, %v691
  %v696 = vmul.f32 %v694, 0.33333334
  %v697 = vmul.f32 %v695, 0.33333334
  %v698 = vld [vmem:[%s4] sm:$0x1]
  %v700 = vlaneseq
  %v701 = vshrl.u32 %v700, 7
  %v702 = vsub.s32 0, %v701
  %v703 = vrot.slane %v698, %v702
  %v705 = vadd.f32 %v696, %v703
  %v706 = vadd.f32 %v697, %v703
  %v707 = vld [vmem:[%s5] sm:$0xff]
  %v708 = vld [vmem:[%s5 + $0x8] sm:$0xff]
  %v709 = vld [vmem:[%s5 + $0x10] sm:$0xff]
  %v710 = vld [vmem:[%s5 + $0x18] sm:$0xff]
  %v711 = vld [vmem:[%s5 + $0x20] sm:$0xff]
  %v712 = vld [vmem:[%s5 + $0x28] sm:$0xff]
  %v713 = vld [vmem:[%s5 + $0x30] sm:$0xff]
  %v714 = vld [vmem:[%s5 + $0x38] sm:$0xff]
  %v715 = vld [vmem:[%s5 + $0x40] sm:$0xff]
  %v716 = vld [vmem:[%s5 + $0x48] sm:$0xff]
  %v717 = vld [vmem:[%s5 + $0x50] sm:$0xff]
  %v718 = vld [vmem:[%s5 + $0x58] sm:$0xff]
  %v719 = vld [vmem:[%s5 + $0x60] sm:$0xff]
  %v720 = vld [vmem:[%s5 + $0x68] sm:$0xff]
  %v721 = vld [vmem:[%s5 + $0x70] sm:$0xff]
  %v722 = vld [vmem:[%s5 + $0x78] sm:$0xff]
  %v723 = vld [vmem:[%s5 + $0x80] sm:$0xff]
  %v724 = vld [vmem:[%s5 + $0x88] sm:$0xff]
  %v725 = vld [vmem:[%s5 + $0x90] sm:$0xff]
  %v726 = vld [vmem:[%s5 + $0x98] sm:$0xff]
  %v727 = vld [vmem:[%s5 + $0xa0] sm:$0xff]
  %v728 = vld [vmem:[%s5 + $0xa8] sm:$0xff]
  %v729 = vld [vmem:[%s5 + $0xb0] sm:$0xff]
  %v730 = vld [vmem:[%s5 + $0xb8] sm:$0xff]
  %v731 = vld [vmem:[%s5 + $0xc0] sm:$0xff]
  %v732 = vld [vmem:[%s5 + $0xc8] sm:$0xff]
  %v733 = vld [vmem:[%s5 + $0xd0] sm:$0xff]
  %v734 = vld [vmem:[%s5 + $0xd8] sm:$0xff]
  %v735 = vld [vmem:[%s5 + $0xe0] sm:$0xff]
  %v736 = vld [vmem:[%s5 + $0xe8] sm:$0xff]
  %v737 = vld [vmem:[%s5 + $0xf0] sm:$0xff]
  %v738 = vld [vmem:[%s5 + $0xf8] sm:$0xff]
  %v739 = vld [vmem:[%s6] sm:$0xff]
  %v741 = vlaneseq
  %v742 = vshrl.u32 %v741, 7
  %v743 = vsub.s32 0, %v742
  %v744 = vrot.slane %v739, %v743
  %v745 = vlaneseq
  %v746 = vshrl.u32 %v745, 7
  %v747 = vsub.s32 1, %v746
  %v748 = vrot.slane %v739, %v747
  %v749 = vlaneseq
  %v750 = vshrl.u32 %v749, 7
  %v751 = vsub.s32 2, %v750
  %v752 = vrot.slane %v739, %v751
  %v753 = vlaneseq
  %v754 = vshrl.u32 %v753, 7
  %v755 = vsub.s32 3, %v754
  %v756 = vrot.slane %v739, %v755
  %v757 = vlaneseq
  %v758 = vshrl.u32 %v757, 7
  %v759 = vsub.s32 4, %v758
  %v760 = vrot.slane %v739, %v759
  %v761 = vlaneseq
  %v762 = vshrl.u32 %v761, 7
  %v763 = vsub.s32 5, %v762
  %v764 = vrot.slane %v739, %v763
  %v765 = vlaneseq
  %v766 = vshrl.u32 %v765, 7
  %v767 = vsub.s32 6, %v766
  %v768 = vrot.slane %v739, %v767
  %v769 = vlaneseq
  %v770 = vshrl.u32 %v769, 7
  %v771 = vsub.s32 7, %v770
  %v772 = vrot.slane %v739, %v771
  %v782 = vsel %vm44, %v705, 0
  %v785 = vsel %vm44, %v706, 0
  %787 = vmatprep.subr.mxu0 %v708
  %788 = vmatpush1.msra.mxu0 %v707
  %789 = vmatprep.subr.mxu0 %v716
  %790 = vmatpush1.msra.mxu0 %v715
  %791 = vmatprep.subr.mxu0 %v724
  %792 = vmatpush1.msra.mxu0 %v723
  %793 = vmatprep.subr.mxu0 %v732
  %794 = vmatpush1.msra.mxu0 %v731
  %795 = vmatprep.subr.mxu0 0.0
  %796 = vmatpush1.msra.mxu0 0.0
  %797 = vmatprep.subr.mxu0 0.0
  %798 = vmatpush1.msra.mxu0 0.0
  %799 = vmatprep.subr.mxu0 0.0
  %800 = vmatpush1.msra.mxu0 0.0
  %801 = vmatprep.subr.mxu0 0.0
  %802 = vmatpush1.msra.mxu0 0.0
  %803 = vmatprep.subr.mxu0 0.0
  %804 = vmatpush1.msra.mxu0 0.0
  %805 = vmatprep.subr.mxu0 0.0
  %806 = vmatpush1.msra.mxu0 0.0
  %807 = vmatprep.subr.mxu0 0.0
  %808 = vmatpush1.msra.mxu0 0.0
  %809 = vmatprep.subr.mxu0 0.0
  %810 = vmatpush1.msra.mxu0 0.0
  %811 = vmatprep.subr.mxu0 0.0
  %812 = vmatpush1.msra.mxu0 0.0
  %813 = vmatprep.subr.mxu0 0.0
  %814 = vmatpush1.msra.mxu0 0.0
  %815 = vmatprep.subr.mxu0 0.0
  %816 = vmatpush1.msra.mxu0 0.0
  %817 = vmatprep.subr.mxu0 0.0
  %818 = vmatpush1.msra.mxu0 0.0
  %819 = vmatprep.subr.mxu0 0.0
  %820 = vmatpush1.msra.mxu0 0.0
  %821 = vmatprep.subr.mxu0 0.0
  %822 = vmatpush1.msra.mxu0 0.0
  %823 = vmatprep.subr.mxu0 0.0
  %824 = vmatpush1.msra.mxu0 0.0
  %825 = vmatprep.subr.mxu0 0.0
  %826 = vmatpush1.msra.mxu0 0.0
  %827 = vmatprep.subr.mxu0 0.0
  %828 = vmatpush1.msra.mxu0 0.0
  %829 = vmatprep.subr.mxu0 0.0
  %830 = vmatpush1.msra.mxu0 0.0
  %831 = vmatprep.subr.mxu0 0.0
  %832 = vmatpush1.msra.mxu0 0.0
  %833 = vmatprep.subr.mxu0 0.0
  %834 = vmatpush1.msra.mxu0 0.0
  %835 = vmatprep.subr.mxu0 0.0
  %836 = vmatpush1.msra.mxu0 0.0
  %837 = vmatprep.subr.mxu0 0.0
  %838 = vmatpush1.msra.mxu0 0.0
  %839 = vmatprep.subr.mxu0 0.0
  %840 = vmatpush1.msra.mxu0 0.0
  %841 = vmatprep.subr.mxu0 0.0
  %842 = vmatpush1.msra.mxu0 0.0
  %843 = vmatprep.subr.mxu0 0.0
  %844 = vmatpush1.msra.mxu0 0.0
  %845 = vmatprep.subr.mxu0 0.0
  %846 = vmatpush1.msra.mxu0 0.0
  %847 = vmatprep.subr.mxu0 0.0
  %848 = vmatpush1.msra.mxu0 0.0
  %849 = vmatprep.subr.mxu0 0.0
  %850 = vmatpush1.msra.mxu0 0.0
  %851 = vmatprep.mubr.f32.mxu0 0.0
  %852 = vmatmul.mubr.f32.gmra.mrb[0].mxu0 %v782
  %v853 = vpop.f32.mrb[0].mxu0
  %v854 = vadd.f32 %v744, %v853
  %v855 = vpop.f32.mrb[0].mxu0
  %v856 = vadd.f32 %v748, %v855
  %857 = vmatprep.mubr.f32.mxu0 0.0
  %858 = vmatmul.mubr.f32.gmra.mrb[0].mxu0 %v785
  %v859 = vpop.f32.mrb[0].mxu0
  %v860 = vadd.f32 %v744, %v859
  %v861 = vpop.f32.mrb[0].mxu0
  %v862 = vadd.f32 %v748, %v861
  %863 = vdwg.mxu0
  %864 = vmatprep.subr.mxu0 %v710
  %865 = vmatpush1.msra.mxu0 %v709
  %866 = vmatprep.subr.mxu0 %v718
  %867 = vmatpush1.msra.mxu0 %v717
  %868 = vmatprep.subr.mxu0 %v726
  %869 = vmatpush1.msra.mxu0 %v725
  %870 = vmatprep.subr.mxu0 %v734
  %871 = vmatpush1.msra.mxu0 %v733
  %872 = vmatprep.subr.mxu0 0.0
  %873 = vmatpush1.msra.mxu0 0.0
  %874 = vmatprep.subr.mxu0 0.0
  %875 = vmatpush1.msra.mxu0 0.0
  %876 = vmatprep.subr.mxu0 0.0
  %877 = vmatpush1.msra.mxu0 0.0
  %878 = vmatprep.subr.mxu0 0.0
  %879 = vmatpush1.msra.mxu0 0.0
  %880 = vmatprep.subr.mxu0 0.0
  %881 = vmatpush1.msra.mxu0 0.0
  %882 = vmatprep.subr.mxu0 0.0
  %883 = vmatpush1.msra.mxu0 0.0
  %884 = vmatprep.subr.mxu0 0.0
  %885 = vmatpush1.msra.mxu0 0.0
  %886 = vmatprep.subr.mxu0 0.0
  %887 = vmatpush1.msra.mxu0 0.0
  %888 = vmatprep.subr.mxu0 0.0
  %889 = vmatpush1.msra.mxu0 0.0
  %890 = vmatprep.subr.mxu0 0.0
  %891 = vmatpush1.msra.mxu0 0.0
  %892 = vmatprep.subr.mxu0 0.0
  %893 = vmatpush1.msra.mxu0 0.0
  %894 = vmatprep.subr.mxu0 0.0
  %895 = vmatpush1.msra.mxu0 0.0
  %896 = vmatprep.subr.mxu0 0.0
  %897 = vmatpush1.msra.mxu0 0.0
  %898 = vmatprep.subr.mxu0 0.0
  %899 = vmatpush1.msra.mxu0 0.0
  %900 = vmatprep.subr.mxu0 0.0
  %901 = vmatpush1.msra.mxu0 0.0
  %902 = vmatprep.subr.mxu0 0.0
  %903 = vmatpush1.msra.mxu0 0.0
  %904 = vmatprep.subr.mxu0 0.0
  %905 = vmatpush1.msra.mxu0 0.0
  %906 = vmatprep.subr.mxu0 0.0
  %907 = vmatpush1.msra.mxu0 0.0
  %908 = vmatprep.subr.mxu0 0.0
  %909 = vmatpush1.msra.mxu0 0.0
  %910 = vmatprep.subr.mxu0 0.0
  %911 = vmatpush1.msra.mxu0 0.0
  %912 = vmatprep.subr.mxu0 0.0
  %913 = vmatpush1.msra.mxu0 0.0
  %914 = vmatprep.subr.mxu0 0.0
  %915 = vmatpush1.msra.mxu0 0.0
  %916 = vmatprep.subr.mxu0 0.0
  %917 = vmatpush1.msra.mxu0 0.0
  %918 = vmatprep.subr.mxu0 0.0
  %919 = vmatpush1.msra.mxu0 0.0
  %920 = vmatprep.subr.mxu0 0.0
  %921 = vmatpush1.msra.mxu0 0.0
  %922 = vmatprep.subr.mxu0 0.0
  %923 = vmatpush1.msra.mxu0 0.0
  %924 = vmatprep.subr.mxu0 0.0
  %925 = vmatpush1.msra.mxu0 0.0
  %926 = vmatprep.subr.mxu0 0.0
  %927 = vmatpush1.msra.mxu0 0.0
  %928 = vmatprep.mubr.f32.mxu0 0.0
  %929 = vmatmul.mubr.f32.gmra.mrb[0].mxu0 %v782
  %v930 = vpop.f32.mrb[0].mxu0
  %v931 = vadd.f32 %v752, %v930
  %v932 = vpop.f32.mrb[0].mxu0
  %v933 = vadd.f32 %v756, %v932
  %934 = vmatprep.mubr.f32.mxu0 0.0
  %935 = vmatmul.mubr.f32.gmra.mrb[0].mxu0 %v785
  %v936 = vpop.f32.mrb[0].mxu0
  %v937 = vadd.f32 %v752, %v936
  %v938 = vpop.f32.mrb[0].mxu0
  %v939 = vadd.f32 %v756, %v938
  %940 = vdwg.mxu0
  %941 = vmatprep.subr.mxu0 %v712
  %942 = vmatpush1.msra.mxu0 %v711
  %943 = vmatprep.subr.mxu0 %v720
  %944 = vmatpush1.msra.mxu0 %v719
  %945 = vmatprep.subr.mxu0 %v728
  %946 = vmatpush1.msra.mxu0 %v727
  %947 = vmatprep.subr.mxu0 %v736
  %948 = vmatpush1.msra.mxu0 %v735
  %949 = vmatprep.subr.mxu0 0.0
  %950 = vmatpush1.msra.mxu0 0.0
  %951 = vmatprep.subr.mxu0 0.0
  %952 = vmatpush1.msra.mxu0 0.0
  %953 = vmatprep.subr.mxu0 0.0
  %954 = vmatpush1.msra.mxu0 0.0
  %955 = vmatprep.subr.mxu0 0.0
  %956 = vmatpush1.msra.mxu0 0.0
  %957 = vmatprep.subr.mxu0 0.0
  %958 = vmatpush1.msra.mxu0 0.0
  %959 = vmatprep.subr.mxu0 0.0
  %960 = vmatpush1.msra.mxu0 0.0
  %961 = vmatprep.subr.mxu0 0.0
  %962 = vmatpush1.msra.mxu0 0.0
  %963 = vmatprep.subr.mxu0 0.0
  %964 = vmatpush1.msra.mxu0 0.0
  %965 = vmatprep.subr.mxu0 0.0
  %966 = vmatpush1.msra.mxu0 0.0
  %967 = vmatprep.subr.mxu0 0.0
  %968 = vmatpush1.msra.mxu0 0.0
  %969 = vmatprep.subr.mxu0 0.0
  %970 = vmatpush1.msra.mxu0 0.0
  %971 = vmatprep.subr.mxu0 0.0
  %972 = vmatpush1.msra.mxu0 0.0
  %973 = vmatprep.subr.mxu0 0.0
  %974 = vmatpush1.msra.mxu0 0.0
  %975 = vmatprep.subr.mxu0 0.0
  %976 = vmatpush1.msra.mxu0 0.0
  %977 = vmatprep.subr.mxu0 0.0
  %978 = vmatpush1.msra.mxu0 0.0
  %979 = vmatprep.subr.mxu0 0.0
  %980 = vmatpush1.msra.mxu0 0.0
  %981 = vmatprep.subr.mxu0 0.0
  %982 = vmatpush1.msra.mxu0 0.0
  %983 = vmatprep.subr.mxu0 0.0
  %984 = vmatpush1.msra.mxu0 0.0
  %985 = vmatprep.subr.mxu0 0.0
  %986 = vmatpush1.msra.mxu0 0.0
  %987 = vmatprep.subr.mxu0 0.0
  %988 = vmatpush1.msra.mxu0 0.0
  %989 = vmatprep.subr.mxu0 0.0
  %990 = vmatpush1.msra.mxu0 0.0
  %991 = vmatprep.subr.mxu0 0.0
  %992 = vmatpush1.msra.mxu0 0.0
  %993 = vmatprep.subr.mxu0 0.0
  %994 = vmatpush1.msra.mxu0 0.0
  %995 = vmatprep.subr.mxu0 0.0
  %996 = vmatpush1.msra.mxu0 0.0
  %997 = vmatprep.subr.mxu0 0.0
  %998 = vmatpush1.msra.mxu0 0.0
  %999 = vmatprep.subr.mxu0 0.0
  %1000 = vmatpush1.msra.mxu0 0.0
  %1001 = vmatprep.subr.mxu0 0.0
  %1002 = vmatpush1.msra.mxu0 0.0
  %1003 = vmatprep.subr.mxu0 0.0
  %1004 = vmatpush1.msra.mxu0 0.0
  %1005 = vmatprep.mubr.f32.mxu0 0.0
  %1006 = vmatmul.mubr.f32.gmra.mrb[0].mxu0 %v782
  %v1007 = vpop.f32.mrb[0].mxu0
  %v1008 = vadd.f32 %v760, %v1007
  %v1009 = vpop.f32.mrb[0].mxu0
  %v1010 = vadd.f32 %v764, %v1009
  %1011 = vmatprep.mubr.f32.mxu0 0.0
  %1012 = vmatmul.mubr.f32.gmra.mrb[0].mxu0 %v785
  %v1013 = vpop.f32.mrb[0].mxu0
  %v1014 = vadd.f32 %v760, %v1013
  %v1015 = vpop.f32.mrb[0].mxu0
  %v1016 = vadd.f32 %v764, %v1015
  %1017 = vdwg.mxu0
  %1018 = vmatprep.subr.mxu0 %v714
  %1019 = vmatpush1.msra.mxu0 %v713
  %1020 = vmatprep.subr.mxu0 %v722
  %1021 = vmatpush1.msra.mxu0 %v721
  %1022 = vmatprep.subr.mxu0 %v730
  %1023 = vmatpush1.msra.mxu0 %v729
  %1024 = vmatprep.subr.mxu0 %v738
  %1025 = vmatpush1.msra.mxu0 %v737
  %1026 = vmatprep.subr.mxu0 0.0
  %1027 = vmatpush1.msra.mxu0 0.0
  %1028 = vmatprep.subr.mxu0 0.0
  %1029 = vmatpush1.msra.mxu0 0.0
  %1030 = vmatprep.subr.mxu0 0.0
  %1031 = vmatpush1.msra.mxu0 0.0
  %1032 = vmatprep.subr.mxu0 0.0
  %1033 = vmatpush1.msra.mxu0 0.0
  %1034 = vmatprep.subr.mxu0 0.0
  %1035 = vmatpush1.msra.mxu0 0.0
  %1036 = vmatprep.subr.mxu0 0.0
  %1037 = vmatpush1.msra.mxu0 0.0
  %1038 = vmatprep.subr.mxu0 0.0
  %1039 = vmatpush1.msra.mxu0 0.0
  %1040 = vmatprep.subr.mxu0 0.0
  %1041 = vmatpush1.msra.mxu0 0.0
  %1042 = vmatprep.subr.mxu0 0.0
  %1043 = vmatpush1.msra.mxu0 0.0
  %1044 = vmatprep.subr.mxu0 0.0
  %1045 = vmatpush1.msra.mxu0 0.0
  %1046 = vmatprep.subr.mxu0 0.0
  %1047 = vmatpush1.msra.mxu0 0.0
  %1048 = vmatprep.subr.mxu0 0.0
  %1049 = vmatpush1.msra.mxu0 0.0
  %1050 = vmatprep.subr.mxu0 0.0
  %1051 = vmatpush1.msra.mxu0 0.0
  %1052 = vmatprep.subr.mxu0 0.0
  %1053 = vmatpush1.msra.mxu0 0.0
  %1054 = vmatprep.subr.mxu0 0.0
  %1055 = vmatpush1.msra.mxu0 0.0
  %1056 = vmatprep.subr.mxu0 0.0
  %1057 = vmatpush1.msra.mxu0 0.0
  %1058 = vmatprep.subr.mxu0 0.0
  %1059 = vmatpush1.msra.mxu0 0.0
  %1060 = vmatprep.subr.mxu0 0.0
  %1061 = vmatpush1.msra.mxu0 0.0
  %1062 = vmatprep.subr.mxu0 0.0
  %1063 = vmatpush1.msra.mxu0 0.0
  %1064 = vmatprep.subr.mxu0 0.0
  %1065 = vmatpush1.msra.mxu0 0.0
  %1066 = vmatprep.subr.mxu0 0.0
  %1067 = vmatpush1.msra.mxu0 0.0
  %1068 = vmatprep.subr.mxu0 0.0
  %1069 = vmatpush1.msra.mxu0 0.0
  %1070 = vmatprep.subr.mxu0 0.0
  %1071 = vmatpush1.msra.mxu0 0.0
  %1072 = vmatprep.subr.mxu0 0.0
  %1073 = vmatpush1.msra.mxu0 0.0
  %1074 = vmatprep.subr.mxu0 0.0
  %1075 = vmatpush1.msra.mxu0 0.0
  %1076 = vmatprep.subr.mxu0 0.0
  %1077 = vmatpush1.msra.mxu0 0.0
  %1078 = vmatprep.subr.mxu0 0.0
  %1079 = vmatpush1.msra.mxu0 0.0
  %1080 = vmatprep.subr.mxu0 0.0
  %1081 = vmatpush1.msra.mxu0 0.0
  %1082 = vmatprep.mubr.f32.mxu0 0.0
  %1083 = vmatmul.mubr.f32.gmra.mrb[0].mxu0 %v782
  %v1084 = vpop.f32.mrb[0].mxu0
  %v1085 = vadd.f32 %v768, %v1084
  %v1086 = vpop.f32.mrb[0].mxu0
  %v1087 = vadd.f32 %v772, %v1086
  %1088 = vmatprep.mubr.f32.mxu0 0.0
  %1089 = vmatmul.mubr.f32.gmra.mrb[0].mxu0 %v785
  %v1090 = vpop.f32.mrb[0].mxu0
  %v1091 = vadd.f32 %v768, %v1090
  %v1092 = vpop.f32.mrb[0].mxu0
  %v1093 = vadd.f32 %v772, %v1092
  %1094 = vdwg.mxu0
  %v1095 = vld [vmem:[%s7] sm:$0xff]
  %v1096 = vld [vmem:[%s7 + $0x8] sm:$0xff]
  %v1097 = vld [vmem:[%s7 + $0x10] sm:$0xff]
  %v1098 = vld [vmem:[%s7 + $0x18] sm:$0xff]
  %v1099 = vld [vmem:[%s8] sm:$0x1]
  %v1101 = vlaneseq
  %v1102 = vshrl.u32 %v1101, 7
  %v1103 = vsub.s32 0, %v1102
  %v1104 = vrot.slane %v1099, %v1103
  %v1107 = vsel %vm44, 0.0, 0
  %1109 = vmatprep.subr.mxu0 0.0
  %1110 = vmatpush1.msra.mxu0 %v1095
  %1111 = vmatprep.subr.mxu0 0.0
  %1112 = vmatpush1.msra.mxu0 %v1096
  %1113 = vmatprep.subr.mxu0 0.0
  %1114 = vmatpush1.msra.mxu0 %v1097
  %1115 = vmatprep.subr.mxu0 0.0
  %1116 = vmatpush1.msra.mxu0 %v1098
  %1117 = vmatprep.subr.mxu0 0.0
  %1118 = vmatpush1.msra.mxu0 0.0
  %1119 = vmatprep.subr.mxu0 0.0
  %1120 = vmatpush1.msra.mxu0 0.0
  %1121 = vmatprep.subr.mxu0 0.0
  %1122 = vmatpush1.msra.mxu0 0.0
  %1123 = vmatprep.subr.mxu0 0.0
  %1124 = vmatpush1.msra.mxu0 0.0
  %1125 = vmatprep.subr.mxu0 0.0
  %1126 = vmatpush1.msra.mxu0 0.0
  %1127 = vmatprep.subr.mxu0 0.0
  %1128 = vmatpush1.msra.mxu0 0.0
  %1129 = vmatprep.subr.mxu0 0.0
  %1130 = vmatpush1.msra.mxu0 0.0
  %1131 = vmatprep.subr.mxu0 0.0
  %1132 = vmatpush1.msra.mxu0 0.0
  %1133 = vmatprep.subr.mxu0 0.0
  %1134 = vmatpush1.msra.mxu0 0.0
  %1135 = vmatprep.subr.mxu0 0.0
  %1136 = vmatpush1.msra.mxu0 0.0
  %1137 = vmatprep.subr.mxu0 0.0
  %1138 = vmatpush1.msra.mxu0 0.0
  %1139 = vmatprep.subr.mxu0 0.0
  %1140 = vmatpush1.msra.mxu0 0.0
  %1141 = vmatprep.subr.mxu0 0.0
  %1142 = vmatpush1.msra.mxu0 0.0
  %1143 = vmatprep.subr.mxu0 0.0
  %1144 = vmatpush1.msra.mxu0 0.0
  %1145 = vmatprep.subr.mxu0 0.0
  %1146 = vmatpush1.msra.mxu0 0.0
  %1147 = vmatprep.subr.mxu0 0.0
  %1148 = vmatpush1.msra.mxu0 0.0
  %1149 = vmatprep.subr.mxu0 0.0
  %1150 = vmatpush1.msra.mxu0 0.0
  %1151 = vmatprep.subr.mxu0 0.0
  %1152 = vmatpush1.msra.mxu0 0.0
  %1153 = vmatprep.subr.mxu0 0.0
  %1154 = vmatpush1.msra.mxu0 0.0
  %1155 = vmatprep.subr.mxu0 0.0
  %1156 = vmatpush1.msra.mxu0 0.0
  %1157 = vmatprep.subr.mxu0 0.0
  %1158 = vmatpush1.msra.mxu0 0.0
  %1159 = vmatprep.subr.mxu0 0.0
  %1160 = vmatpush1.msra.mxu0 0.0
  %1161 = vmatprep.subr.mxu0 0.0
  %1162 = vmatpush1.msra.mxu0 0.0
  %1163 = vmatprep.subr.mxu0 0.0
  %1164 = vmatpush1.msra.mxu0 0.0
  %1165 = vmatprep.subr.mxu0 0.0
  %1166 = vmatpush1.msra.mxu0 0.0
  %1167 = vmatprep.subr.mxu0 0.0
  %1168 = vmatpush1.msra.mxu0 0.0
  %1169 = vmatprep.subr.mxu0 0.0
  %1170 = vmatpush1.msra.mxu0 0.0
  %1171 = vmatprep.subr.mxu0 0.0
  %1172 = vmatpush1.msra.mxu0 0.0
  %1173 = vmatprep.mubr.f32.mxu0 0.0
  %1174 = vmatmul.mubr.f32.gmra.mrb[0].mxu0 %v1107
  %v1175 = vpop.f32.mrb[0].mxu0
  %v1176 = vadd.f32 %v1104, %v1175
  %v1177 = vpop.f32.mrb[0].mxu0
  %1178 = vmatprep.mubr.f32.mxu0 0.0
  %1179 = vmatmul.mubr.f32.gmra.mrb[0].mxu0 %v1107
  %v1180 = vpop.f32.mrb[0].mxu0
  %v1181 = vadd.f32 %v1104, %v1180
  %v1182 = vpop.f32.mrb[0].mxu0
  %1183 = vdwg.mxu0
  %v1184 = vadd.f32 %v854, %v1176
  %v1185 = vadd.f32 %v860, %v1181
  %v1186 = vxor.u32 %v1184, 2147483648
  %v1187 = vxor.u32 %v1185, 2147483648
  %v1188 = vmul.f32 %v1186, 1.442695
  %v1189 = vpow.pop %v1188
  %v1190 = vmul.f32 %v1187, 1.442695
  %v1191 = vpow.pop %v1190
  %v1192 = vadd.f32 %v1189, 1.0
  %v1193 = vadd.f32 %v1191, 1.0
  %v1194 = vrcp.pop %v1192
  %v1195 = vmul.f32 1.0, %v1194
  %v1196 = vrcp.pop %v1193
  %v1197 = vmul.f32 1.0, %v1196
  %1200 = vrot.lane.b32.xlu0 %v1176, 64
  %v1201 = vpop.permute.xlu0 %1200
  %1202 = vrot.lane.b32.xlu0 %v1181, 64
  %v1203 = vpop.permute.xlu0 %1202
  %v1206 = vmul.f32 %v1195, %v1201
  %v1207 = vmul.f32 %v1197, %v1203
  %1210 = vrot.lane.b32.xlu0 %v1206, 64
  %v1211 = vpop.permute.xlu0 %1210
  %1212 = vrot.lane.b32.xlu0 %v1207, 64
  %v1213 = vpop.permute.xlu0 %1212
  %v1216 = vadd.f32 %v854, %v1211
  %v1217 = vadd.f32 %v860, %v1213
  %v1218 = vtanh.pop %v1216
  %v1219 = vtanh.pop %v1217
  %v1220 = vsub.f32 1.0, %v1195
  %v1221 = vsub.f32 1.0, %v1197
  %1224 = vrot.lane.b32.xlu0 %v1218, 96
  %v1225 = vpop.permute.xlu0 %1224
  %1226 = vrot.lane.b32.xlu0 %v1219, 96
  %v1227 = vpop.permute.xlu0 %1226
  %v1230 = vmul.f32 %v1220, %v1225
  %v1231 = vmul.f32 %v1221, %v1227
  %v1232 = vmul.f32 %v1195, 0.0
  %v1233 = vmul.f32 %v1197, 0.0
  %v1234 = vadd.f32 %v1230, %v1232
  %v1235 = vadd.f32 %v1231, %v1233
  %1238 = vrot.lane.b32.xlu0 %v1234, 96
  %v1239 = vpop.permute.xlu0 %1238
  %1240 = vrot.lane.b32.xlu0 %v1235, 96
  %v1241 = vpop.permute.xlu0 %1240
  %1244 = vst.msk [vmem:[#allocation2] sm:$0xff] %vm44, %v1239
  %1245 = vst.msk [vmem:[#allocation2 + $0x10] sm:$0xff] %vm44, %v1241
  %v1246 = vsel %vm44, %v1239, 0
  %v1248 = vsel %vm44, %v1241, 0
  %1250 = vmatprep.subr.mxu0 0.0
  %1251 = vmatpush1.msra.mxu0 %v1095
  %1252 = vmatprep.subr.mxu0 0.0
  %1253 = vmatpush1.msra.mxu0 %v1096
  %1254 = vmatprep.subr.mxu0 0.0
  %1255 = vmatpush1.msra.mxu0 %v1097
  %1256 = vmatprep.subr.mxu0 0.0
  %1257 = vmatpush1.msra.mxu0 %v1098
  %1258 = vmatprep.subr.mxu0 0.0
  %1259 = vmatpush1.msra.mxu0 0.0
  %1260 = vmatprep.subr.mxu0 0.0
  %1261 = vmatpush1.msra.mxu0 0.0
  %1262 = vmatprep.subr.mxu0 0.0
  %1263 = vmatpush1.msra.mxu0 0.0
  %1264 = vmatprep.subr.mxu0 0.0
  %1265 = vmatpush1.msra.mxu0 0.0
  %1266 = vmatprep.subr.mxu0 0.0
  %1267 = vmatpush1.msra.mxu0 0.0
  %1268 = vmatprep.subr.mxu0 0.0
  %1269 = vmatpush1.msra.mxu0 0.0
  %1270 = vmatprep.subr.mxu0 0.0
  %1271 = vmatpush1.msra.mxu0 0.0
  %1272 = vmatprep.subr.mxu0 0.0
  %1273 = vmatpush1.msra.mxu0 0.0
  %1274 = vmatprep.subr.mxu0 0.0
  %1275 = vmatpush1.msra.mxu0 0.0
  %1276 = vmatprep.subr.mxu0 0.0
  %1277 = vmatpush1.msra.mxu0 0.0
  %1278 = vmatprep.subr.mxu0 0.0
  %1279 = vmatpush1.msra.mxu0 0.0
  %1280 = vmatprep.subr.mxu0 0.0
  %1281 = vmatpush1.msra.mxu0 0.0
  %1282 = vmatprep.subr.mxu0 0.0
  %1283 = vmatpush1.msra.mxu0 0.0
  %1284 = vmatprep.subr.mxu0 0.0
  %1285 = vmatpush1.msra.mxu0 0.0
  %1286 = vmatprep.subr.mxu0 0.0
  %1287 = vmatpush1.msra.mxu0 0.0
  %1288 = vmatprep.subr.mxu0 0.0
  %1289 = vmatpush1.msra.mxu0 0.0
  %1290 = vmatprep.subr.mxu0 0.0
  %1291 = vmatpush1.msra.mxu0 0.0
  %1292 = vmatprep.subr.mxu0 0.0
  %1293 = vmatpush1.msra.mxu0 0.0
  %1294 = vmatprep.subr.mxu0 0.0
  %1295 = vmatpush1.msra.mxu0 0.0
  %1296 = vmatprep.subr.mxu0 0.0
  %1297 = vmatpush1.msra.mxu0 0.0
  %1298 = vmatprep.subr.mxu0 0.0
  %1299 = vmatpush1.msra.mxu0 0.0
  %1300 = vmatprep.subr.mxu0 0.0
  %1301 = vmatpush1.msra.mxu0 0.0
  %1302 = vmatprep.subr.mxu0 0.0
  %1303 = vmatpush1.msra.mxu0 0.0
  %1304 = vmatprep.subr.mxu0 0.0
  %1305 = vmatpush1.msra.mxu0 0.0
  %1306 = vmatprep.subr.mxu0 0.0
  %1307 = vmatpush1.msra.mxu0 0.0
  %1308 = vmatprep.subr.mxu0 0.0
  %1309 = vmatpush1.msra.mxu0 0.0
  %1310 = vmatprep.subr.mxu0 0.0
  %1311 = vmatpush1.msra.mxu0 0.0
  %1312 = vmatprep.subr.mxu0 0.0
  %1313 = vmatpush1.msra.mxu0 0.0
  %1314 = vmatprep.mubr.f32.mxu0 0.0
  %1315 = vmatmul.mubr.f32.gmra.mrb[0].mxu0 %v1246
  %v1316 = vpop.f32.mrb[0].mxu0
  %v1317 = vadd.f32 %v1104, %v1316
  %v1318 = vpop.f32.mrb[0].mxu0
  %1319 = vmatprep.mubr.f32.mxu0 0.0
  %1320 = vmatmul.mubr.f32.gmra.mrb[0].mxu0 %v1248
  %v1321 = vpop.f32.mrb[0].mxu0
  %v1322 = vadd.f32 %v1104, %v1321
  %v1323 = vpop.f32.mrb[0].mxu0
  %1324 = vdwg.mxu0
  %v1325 = vadd.f32 %v856, %v1317
  %v1326 = vadd.f32 %v862, %v1322
  %v1327 = vxor.u32 %v1325, 2147483648
  %v1328 = vxor.u32 %v1326, 2147483648
  %v1329 = vmul.f32 %v1327, 1.442695
  %v1330 = vpow.pop %v1329
  %v1331 = vmul.f32 %v1328, 1.442695
  %v1332 = vpow.pop %v1331
  %v1333 = vadd.f32 %v1330, 1.0
  %v1334 = vadd.f32 %v1332, 1.0
  %v1335 = vrcp.pop %v1333
  %v1336 = vmul.f32 1.0, %v1335
  %v1337 = vrcp.pop %v1334
  %v1338 = vmul.f32 1.0, %v1337
  %1341 = vrot.lane.b32.xlu0 %v1317, 64
  %v1342 = vpop.permute.xlu0 %1341
  %1343 = vrot.lane.b32.xlu0 %v1322, 64
  %v1344 = vpop.permute.xlu0 %1343
  %v1347 = vmul.f32 %v1336, %v1342
  %v1348 = vmul.f32 %v1338, %v1344
  %1351 = vrot.lane.b32.xlu0 %v1347, 64
  %v1352 = vpop.permute.xlu0 %1351
  %1353 = vrot.lane.b32.xlu0 %v1348, 64
  %v1354 = vpop.permute.xlu0 %1353
  %v1357 = vadd.f32 %v856, %v1352
  %v1358 = vadd.f32 %v862, %v1354
  %v1359 = vtanh.pop %v1357
  %v1360 = vtanh.pop %v1358
  %v1361 = vsub.f32 1.0, %v1336
  %v1362 = vsub.f32 1.0, %v1338
  %1365 = vrot.lane.b32.xlu0 %v1359, 96
  %v1366 = vpop.permute.xlu0 %1365
  %1367 = vrot.lane.b32.xlu0 %v1360, 96
  %v1368 = vpop.permute.xlu0 %1367
  %v1371 = vmul.f32 %v1361, %v1366
  %v1372 = vmul.f32 %v1362, %v1368
  %v1373 = vmul.f32 %v1336, %v1234
  %v1374 = vmul.f32 %v1338, %v1235
  %v1375 = vadd.f32 %v1371, %v1373
  %v1376 = vadd.f32 %v1372, %v1374
  %vm1377 = vcmask 523520
  %1378 = vst.msk [vmem:[#allocation2] sm:$0xff] %vm1377, %v1375
  %1379 = vst.msk [vmem:[#allocation2 + $0x10] sm:$0xff] %vm1377, %v1376
  %1382 = vrot.lane.b32.xlu0 %v1375, 96
  %v1383 = vpop.permute.xlu0 %1382
  %1384 = vrot.lane.b32.xlu0 %v1376, 96
  %v1385 = vpop.permute.xlu0 %1384
  %v1386 = vsel %vm44, %v1383, 0
  %v1388 = vsel %vm44, %v1385, 0
  %1390 = vmatprep.subr.mxu0 0.0
  %1391 = vmatpush1.msra.mxu0 %v1095
  %1392 = vmatprep.subr.mxu0 0.0
  %1393 = vmatpush1.msra.mxu0 %v1096
  %1394 = vmatprep.subr.mxu0 0.0
  %1395 = vmatpush1.msra.mxu0 %v1097
  %1396 = vmatprep.subr.mxu0 0.0
  %1397 = vmatpush1.msra.mxu0 %v1098
  %1398 = vmatprep.subr.mxu0 0.0
  %1399 = vmatpush1.msra.mxu0 0.0
  %1400 = vmatprep.subr.mxu0 0.0
  %1401 = vmatpush1.msra.mxu0 0.0
  %1402 = vmatprep.subr.mxu0 0.0
  %1403 = vmatpush1.msra.mxu0 0.0
  %1404 = vmatprep.subr.mxu0 0.0
  %1405 = vmatpush1.msra.mxu0 0.0
  %1406 = vmatprep.subr.mxu0 0.0
  %1407 = vmatpush1.msra.mxu0 0.0
  %1408 = vmatprep.subr.mxu0 0.0
  %1409 = vmatpush1.msra.mxu0 0.0
  %1410 = vmatprep.subr.mxu0 0.0
  %1411 = vmatpush1.msra.mxu0 0.0
  %1412 = vmatprep.subr.mxu0 0.0
  %1413 = vmatpush1.msra.mxu0 0.0
  %1414 = vmatprep.subr.mxu0 0.0
  %1415 = vmatpush1.msra.mxu0 0.0
  %1416 = vmatprep.subr.mxu0 0.0
  %1417 = vmatpush1.msra.mxu0 0.0
  %1418 = vmatprep.subr.mxu0 0.0
  %1419 = vmatpush1.msra.mxu0 0.0
  %1420 = vmatprep.subr.mxu0 0.0
  %1421 = vmatpush1.msra.mxu0 0.0
  %1422 = vmatprep.subr.mxu0 0.0
  %1423 = vmatpush1.msra.mxu0 0.0
  %1424 = vmatprep.subr.mxu0 0.0
  %1425 = vmatpush1.msra.mxu0 0.0
  %1426 = vmatprep.subr.mxu0 0.0
  %1427 = vmatpush1.msra.mxu0 0.0
  %1428 = vmatprep.subr.mxu0 0.0
  %1429 = vmatpush1.msra.mxu0 0.0
  %1430 = vmatprep.subr.mxu0 0.0
  %1431 = vmatpush1.msra.mxu0 0.0
  %1432 = vmatprep.subr.mxu0 0.0
  %1433 = vmatpush1.msra.mxu0 0.0
  %1434 = vmatprep.subr.mxu0 0.0
  %1435 = vmatpush1.msra.mxu0 0.0
  %1436 = vmatprep.subr.mxu0 0.0
  %1437 = vmatpush1.msra.mxu0 0.0
  %1438 = vmatprep.subr.mxu0 0.0
  %1439 = vmatpush1.msra.mxu0 0.0
  %1440 = vmatprep.subr.mxu0 0.0
  %1441 = vmatpush1.msra.mxu0 0.0
  %1442 = vmatprep.subr.mxu0 0.0
  %1443 = vmatpush1.msra.mxu0 0.0
  %1444 = vmatprep.subr.mxu0 0.0
  %1445 = vmatpush1.msra.mxu0 0.0
  %1446 = vmatprep.subr.mxu0 0.0
  %1447 = vmatpush1.msra.mxu0 0.0
  %1448 = vmatprep.subr.mxu0 0.0
  %1449 = vmatpush1.msra.mxu0 0.0
  %1450 = vmatprep.subr.mxu0 0.0
  %1451 = vmatpush1.msra.mxu0 0.0
  %1452 = vmatprep.subr.mxu0 0.0
  %1453 = vmatpush1.msra.mxu0 0.0
  %1454 = vmatprep.mubr.f32.mxu0 0.0
  %1455 = vmatmul.mubr.f32.gmra.mrb[0].mxu0 %v1386
  %v1456 = vpop.f32.mrb[0].mxu0
  %v1457 = vadd.f32 %v1104, %v1456
  %v1458 = vpop.f32.mrb[0].mxu0
  %1459 = vmatprep.mubr.f32.mxu0 0.0
  %1460 = vmatmul.mubr.f32.gmra.mrb[0].mxu0 %v1388
  %v1461 = vpop.f32.mrb[0].mxu0
  %v1462 = vadd.f32 %v1104, %v1461
  %v1463 = vpop.f32.mrb[0].mxu0
  %1464 = vdwg.mxu0
  %v1465 = vadd.f32 %v931, %v1457
  %v1466 = vadd.f32 %v937, %v1462
  %v1467 = vxor.u32 %v1465, 2147483648
  %v1468 = vxor.u32 %v1466, 2147483648
  %v1469 = vmul.f32 %v1467, 1.442695
  %v1470 = vpow.pop %v1469
  %v1471 = vmul.f32 %v1468, 1.442695
  %v1472 = vpow.pop %v1471
  %v1473 = vadd.f32 %v1470, 1.0
  %v1474 = vadd.f32 %v1472, 1.0
  %v1475 = vrcp.pop %v1473
  %v1476 = vmul.f32 1.0, %v1475
  %v1477 = vrcp.pop %v1474
  %v1478 = vmul.f32 1.0, %v1477
  %1481 = vrot.lane.b32.xlu0 %v1457, 64
  %v1482 = vpop.permute.xlu0 %1481
  %1483 = vrot.lane.b32.xlu0 %v1462, 64
  %v1484 = vpop.permute.xlu0 %1483
  %v1487 = vmul.f32 %v1476, %v1482
  %v1488 = vmul.f32 %v1478, %v1484
  %1491 = vrot.lane.b32.xlu0 %v1487, 64
  %v1492 = vpop.permute.xlu0 %1491
  %1493 = vrot.lane.b32.xlu0 %v1488, 64
  %v1494 = vpop.permute.xlu0 %1493
  %v1497 = vadd.f32 %v931, %v1492
  %v1498 = vadd.f32 %v937, %v1494
  %v1499 = vtanh.pop %v1497
  %v1500 = vtanh.pop %v1498
  %v1501 = vsub.f32 1.0, %v1476
  %v1502 = vsub.f32 1.0, %v1478
  %1505 = vrot.lane.b32.xlu0 %v1499, 96
  %v1506 = vpop.permute.xlu0 %1505
  %1507 = vrot.lane.b32.xlu0 %v1500, 96
  %v1508 = vpop.permute.xlu0 %1507
  %v1511 = vmul.f32 %v1501, %v1506
  %v1512 = vmul.f32 %v1502, %v1508
  %v1513 = vmul.f32 %v1476, %v1375
  %v1514 = vmul.f32 %v1478, %v1376
  %v1515 = vadd.f32 %v1511, %v1513
  %v1516 = vadd.f32 %v1512, %v1514
  %1519 = vrot.lane.b32.xlu0 %v1515, 32
  %v1520 = vpop.permute.xlu0 %1519
  %1521 = vrot.lane.b32.xlu0 %v1516, 32
  %v1522 = vpop.permute.xlu0 %1521
  %vm1525 = vcmask 785920
  %1526 = vst.msk [vmem:[#allocation2] sm:$0xff] %vm1525, %v1520
  %1527 = vst.msk [vmem:[#allocation2 + $0x10] sm:$0xff] %vm1525, %v1522
  %1528 = vrot.lane.b32.xlu0 %v1515, 96
  %v1529 = vpop.permute.xlu0 %1528
  %1530 = vrot.lane.b32.xlu0 %v1516, 96
  %v1531 = vpop.permute.xlu0 %1530
  %v1532 = vsel %vm44, %v1529, 0
  %v1534 = vsel %vm44, %v1531, 0
  %1536 = vmatprep.subr.mxu0 0.0
  %1537 = vmatpush1.msra.mxu0 %v1095
  %1538 = vmatprep.subr.mxu0 0.0
  %1539 = vmatpush1.msra.mxu0 %v1096
  %1540 = vmatprep.subr.mxu0 0.0
  %1541 = vmatpush1.msra.mxu0 %v1097
  %1542 = vmatprep.subr.mxu0 0.0
  %1543 = vmatpush1.msra.mxu0 %v1098
  %1544 = vmatprep.subr.mxu0 0.0
  %1545 = vmatpush1.msra.mxu0 0.0
  %1546 = vmatprep.subr.mxu0 0.0
  %1547 = vmatpush1.msra.mxu0 0.0
  %1548 = vmatprep.subr.mxu0 0.0
  %1549 = vmatpush1.msra.mxu0 0.0
  %1550 = vmatprep.subr.mxu0 0.0
  %1551 = vmatpush1.msra.mxu0 0.0
  %1552 = vmatprep.subr.mxu0 0.0
  %1553 = vmatpush1.msra.mxu0 0.0
  %1554 = vmatprep.subr.mxu0 0.0
  %1555 = vmatpush1.msra.mxu0 0.0
  %1556 = vmatprep.subr.mxu0 0.0
  %1557 = vmatpush1.msra.mxu0 0.0
  %1558 = vmatprep.subr.mxu0 0.0
  %1559 = vmatpush1.msra.mxu0 0.0
  %1560 = vmatprep.subr.mxu0 0.0
  %1561 = vmatpush1.msra.mxu0 0.0
  %1562 = vmatprep.subr.mxu0 0.0
  %1563 = vmatpush1.msra.mxu0 0.0
  %1564 = vmatprep.subr.mxu0 0.0
  %1565 = vmatpush1.msra.mxu0 0.0
  %1566 = vmatprep.subr.mxu0 0.0
  %1567 = vmatpush1.msra.mxu0 0.0
  %1568 = vmatprep.subr.mxu0 0.0
  %1569 = vmatpush1.msra.mxu0 0.0
  %1570 = vmatprep.subr.mxu0 0.0
  %1571 = vmatpush1.msra.mxu0 0.0
  %1572 = vmatprep.subr.mxu0 0.0
  %1573 = vmatpush1.msra.mxu0 0.0
  %1574 = vmatprep.subr.mxu0 0.0
  %1575 = vmatpush1.msra.mxu0 0.0
  %1576 = vmatprep.subr.mxu0 0.0
  %1577 = vmatpush1.msra.mxu0 0.0
  %1578 = vmatprep.subr.mxu0 0.0
  %1579 = vmatpush1.msra.mxu0 0.0
  %1580 = vmatprep.subr.mxu0 0.0
  %1581 = vmatpush1.msra.mxu0 0.0
  %1582 = vmatprep.subr.mxu0 0.0
  %1583 = vmatpush1.msra.mxu0 0.0
  %1584 = vmatprep.subr.mxu0 0.0
  %1585 = vmatpush1.msra.mxu0 0.0
  %1586 = vmatprep.subr.mxu0 0.0
  %1587 = vmatpush1.msra.mxu0 0.0
  %1588 = vmatprep.subr.mxu0 0.0
  %1589 = vmatpush1.msra.mxu0 0.0
  %1590 = vmatprep.subr.mxu0 0.0
  %1591 = vmatpush1.msra.mxu0 0.0
  %1592 = vmatprep.subr.mxu0 0.0
  %1593 = vmatpush1.msra.mxu0 0.0
  %1594 = vmatprep.subr.mxu0 0.0
  %1595 = vmatpush1.msra.mxu0 0.0
  %1596 = vmatprep.subr.mxu0 0.0
  %1597 = vmatpush1.msra.mxu0 0.0
  %1598 = vmatprep.subr.mxu0 0.0
  %1599 = vmatpush1.msra.mxu0 0.0
  %1600 = vmatprep.mubr.f32.mxu0 0.0
  %1601 = vmatmul.mubr.f32.gmra.mrb[0].mxu0 %v1532
  %v1602 = vpop.f32.mrb[0].mxu0
  %v1603 = vadd.f32 %v1104, %v1602
  %v1604 = vpop.f32.mrb[0].mxu0
  %1605 = vmatprep.mubr.f32.mxu0 0.0
  %1606 = vmatmul.mubr.f32.gmra.mrb[0].mxu0 %v1534
  %v1607 = vpop.f32.mrb[0].mxu0
  %v1608 = vadd.f32 %v1104, %v1607
  %v1609 = vpop.f32.mrb[0].mxu0
  %1610 = vdwg.mxu0
  %v1611 = vadd.f32 %v933, %v1603
  %v1612 = vadd.f32 %v939, %v1608
  %v1613 = vxor.u32 %v1611, 2147483648
  %v1614 = vxor.u32 %v1612, 2147483648
  %v1615 = vmul.f32 %v1613, 1.442695
  %v1616 = vpow.pop %v1615
  %v1617 = vmul.f32 %v1614, 1.442695
  %v1618 = vpow.pop %v1617
  %v1619 = vadd.f32 %v1616, 1.0
  %v1620 = vadd.f32 %v1618, 1.0
  %v1621 = vrcp.pop %v1619
  %v1622 = vmul.f32 1.0, %v1621
  %v1623 = vrcp.pop %v1620
  %v1624 = vmul.f32 1.0, %v1623
  %1627 = vrot.lane.b32.xlu0 %v1603, 64
  %v1628 = vpop.permute.xlu0 %1627
  %1629 = vrot.lane.b32.xlu0 %v1608, 64
  %v1630 = vpop.permute.xlu0 %1629
  %v1633 = vmul.f32 %v1622, %v1628
  %v1634 = vmul.f32 %v1624, %v1630
  %1637 = vrot.lane.b32.xlu0 %v1633, 64
  %v1638 = vpop.permute.xlu0 %1637
  %1639 = vrot.lane.b32.xlu0 %v1634, 64
  %v1640 = vpop.permute.xlu0 %1639
  %v1643 = vadd.f32 %v933, %v1638
  %v1644 = vadd.f32 %v939, %v1640
  %v1645 = vtanh.pop %v1643
  %v1646 = vtanh.pop %v1644
  %v1647 = vsub.f32 1.0, %v1622
  %v1648 = vsub.f32 1.0, %v1624
  %1651 = vrot.lane.b32.xlu0 %v1645, 96
  %v1652 = vpop.permute.xlu0 %1651
  %1653 = vrot.lane.b32.xlu0 %v1646, 96
  %v1654 = vpop.permute.xlu0 %1653
  %v1657 = vmul.f32 %v1647, %v1652
  %v1658 = vmul.f32 %v1648, %v1654
  %v1659 = vmul.f32 %v1622, %v1515
  %v1660 = vmul.f32 %v1624, %v1516
  %v1661 = vadd.f32 %v1657, %v1659
  %v1662 = vadd.f32 %v1658, %v1660
  %1665 = vrot.lane.b32.xlu0 %v1661, 64
  %v1666 = vpop.permute.xlu0 %1665
  %1667 = vrot.lane.b32.xlu0 %v1662, 64
  %v1668 = vpop.permute.xlu0 %1667
  %vm1671 = vcmask 1048320
  %1672 = vst.msk [vmem:[#allocation2] sm:$0xff] %vm1671, %v1666
  %1673 = vst.msk [vmem:[#allocation2 + $0x10] sm:$0xff] %vm1671, %v1668
  %1674 = vrot.lane.b32.xlu0 %v1661, 96
  %v1675 = vpop.permute.xlu0 %1674
  %1676 = vrot.lane.b32.xlu0 %v1662, 96
  %v1677 = vpop.permute.xlu0 %1676
  %v1678 = vsel %vm44, %v1675, 0
  %v1680 = vsel %vm44, %v1677, 0
  %1682 = vmatprep.subr.mxu0 0.0
  %1683 = vmatpush1.msra.mxu0 %v1095
  %1684 = vmatprep.subr.mxu0 0.0
  %1685 = vmatpush1.msra.mxu0 %v1096
  %1686 = vmatprep.subr.mxu0 0.0
  %1687 = vmatpush1.msra.mxu0 %v1097
  %1688 = vmatprep.subr.mxu0 0.0
  %1689 = vmatpush1.msra.mxu0 %v1098
  %1690 = vmatprep.subr.mxu0 0.0
  %1691 = vmatpush1.msra.mxu0 0.0
  %1692 = vmatprep.subr.mxu0 0.0
  %1693 = vmatpush1.msra.mxu0 0.0
  %1694 = vmatprep.subr.mxu0 0.0
  %1695 = vmatpush1.msra.mxu0 0.0
  %1696 = vmatprep.subr.mxu0 0.0
  %1697 = vmatpush1.msra.mxu0 0.0
  %1698 = vmatprep.subr.mxu0 0.0
  %1699 = vmatpush1.msra.mxu0 0.0
  %1700 = vmatprep.subr.mxu0 0.0
  %1701 = vmatpush1.msra.mxu0 0.0
  %1702 = vmatprep.subr.mxu0 0.0
  %1703 = vmatpush1.msra.mxu0 0.0
  %1704 = vmatprep.subr.mxu0 0.0
  %1705 = vmatpush1.msra.mxu0 0.0
  %1706 = vmatprep.subr.mxu0 0.0
  %1707 = vmatpush1.msra.mxu0 0.0
  %1708 = vmatprep.subr.mxu0 0.0
  %1709 = vmatpush1.msra.mxu0 0.0
  %1710 = vmatprep.subr.mxu0 0.0
  %1711 = vmatpush1.msra.mxu0 0.0
  %1712 = vmatprep.subr.mxu0 0.0
  %1713 = vmatpush1.msra.mxu0 0.0
  %1714 = vmatprep.subr.mxu0 0.0
  %1715 = vmatpush1.msra.mxu0 0.0
  %1716 = vmatprep.subr.mxu0 0.0
  %1717 = vmatpush1.msra.mxu0 0.0
  %1718 = vmatprep.subr.mxu0 0.0
  %1719 = vmatpush1.msra.mxu0 0.0
  %1720 = vmatprep.subr.mxu0 0.0
  %1721 = vmatpush1.msra.mxu0 0.0
  %1722 = vmatprep.subr.mxu0 0.0
  %1723 = vmatpush1.msra.mxu0 0.0
  %1724 = vmatprep.subr.mxu0 0.0
  %1725 = vmatpush1.msra.mxu0 0.0
  %1726 = vmatprep.subr.mxu0 0.0
  %1727 = vmatpush1.msra.mxu0 0.0
  %1728 = vmatprep.subr.mxu0 0.0
  %1729 = vmatpush1.msra.mxu0 0.0
  %1730 = vmatprep.subr.mxu0 0.0
  %1731 = vmatpush1.msra.mxu0 0.0
  %1732 = vmatprep.subr.mxu0 0.0
  %1733 = vmatpush1.msra.mxu0 0.0
  %1734 = vmatprep.subr.mxu0 0.0
  %1735 = vmatpush1.msra.mxu0 0.0
  %1736 = vmatprep.subr.mxu0 0.0
  %1737 = vmatpush1.msra.mxu0 0.0
  %1738 = vmatprep.subr.mxu0 0.0
  %1739 = vmatpush1.msra.mxu0 0.0
  %1740 = vmatprep.subr.mxu0 0.0
  %1741 = vmatpush1.msra.mxu0 0.0
  %1742 = vmatprep.subr.mxu0 0.0
  %1743 = vmatpush1.msra.mxu0 0.0
  %1744 = vmatprep.subr.mxu0 0.0
  %1745 = vmatpush1.msra.mxu0 0.0
  %1746 = vmatprep.mubr.f32.mxu0 0.0
  %1747 = vmatmul.mubr.f32.gmra.mrb[0].mxu0 %v1678
  %v1748 = vpop.f32.mrb[0].mxu0
  %v1749 = vadd.f32 %v1104, %v1748
  %v1750 = vpop.f32.mrb[0].mxu0
  %1751 = vmatprep.mubr.f32.mxu0 0.0
  %1752 = vmatmul.mubr.f32.gmra.mrb[0].mxu0 %v1680
  %v1753 = vpop.f32.mrb[0].mxu0
  %v1754 = vadd.f32 %v1104, %v1753
  %v1755 = vpop.f32.mrb[0].mxu0
  %1756 = vdwg.mxu0
  %v1757 = vadd.f32 %v1008, %v1749
  %v1758 = vadd.f32 %v1014, %v1754
  %v1759 = vxor.u32 %v1757, 2147483648
  %v1760 = vxor.u32 %v1758, 2147483648
  %v1761 = vmul.f32 %v1759, 1.442695
  %v1762 = vpow.pop %v1761
  %v1763 = vmul.f32 %v1760, 1.442695
  %v1764 = vpow.pop %v1763
  %v1765 = vadd.f32 %v1762, 1.0
  %v1766 = vadd.f32 %v1764, 1.0
  %v1767 = vrcp.pop %v1765
  %v1768 = vmul.f32 1.0, %v1767
  %v1769 = vrcp.pop %v1766
  %v1770 = vmul.f32 1.0, %v1769
  %1773 = vrot.lane.b32.xlu0 %v1749, 64
  %v1774 = vpop.permute.xlu0 %1773
  %1775 = vrot.lane.b32.xlu0 %v1754, 64
  %v1776 = vpop.permute.xlu0 %1775
  %v1779 = vmul.f32 %v1768, %v1774
  %v1780 = vmul.f32 %v1770, %v1776
  %1783 = vrot.lane.b32.xlu0 %v1779, 64
  %v1784 = vpop.permute.xlu0 %1783
  %1785 = vrot.lane.b32.xlu0 %v1780, 64
  %v1786 = vpop.permute.xlu0 %1785
  %v1789 = vadd.f32 %v1008, %v1784
  %v1790 = vadd.f32 %v1014, %v1786
  %v1791 = vtanh.pop %v1789
  %v1792 = vtanh.pop %v1790
  %v1793 = vsub.f32 1.0, %v1768
  %v1794 = vsub.f32 1.0, %v1770
  %1797 = vrot.lane.b32.xlu0 %v1791, 96
  %v1798 = vpop.permute.xlu0 %1797
  %1799 = vrot.lane.b32.xlu0 %v1792, 96
  %v1800 = vpop.permute.xlu0 %1799
  %v1803 = vmul.f32 %v1793, %v1798
  %v1804 = vmul.f32 %v1794, %v1800
  %v1805 = vmul.f32 %v1768, %v1661
  %v1806 = vmul.f32 %v1770, %v1662
  %v1807 = vadd.f32 %v1803, %v1805
  %v1808 = vadd.f32 %v1804, %v1806
  %1811 = vrot.lane.b32.xlu0 %v1807, 96
  %v1812 = vpop.permute.xlu0 %1811
  %1813 = vrot.lane.b32.xlu0 %v1808, 96
  %v1814 = vpop.permute.xlu0 %1813
  %1817 = vst.msk [vmem:[#allocation2 + $0x8] sm:$0xff] %vm44, %v1812
  %1818 = vst.msk [vmem:[#allocation2 + $0x18] sm:$0xff] %vm44, %v1814
  %v1819 = vsel %vm44, %v1812, 0
  %v1821 = vsel %vm44, %v1814, 0
  %1823 = vmatprep.subr.mxu0 0.0
  %1824 = vmatpush1.msra.mxu0 %v1095
  %1825 = vmatprep.subr.mxu0 0.0
  %1826 = vmatpush1.msra.mxu0 %v1096
  %1827 = vmatprep.subr.mxu0 0.0
  %1828 = vmatpush1.msra.mxu0 %v1097
  %1829 = vmatprep.subr.mxu0 0.0
  %1830 = vmatpush1.msra.mxu0 %v1098
  %1831 = vmatprep.subr.mxu0 0.0
  %1832 = vmatpush1.msra.mxu0 0.0
  %1833 = vmatprep.subr.mxu0 0.0
  %1834 = vmatpush1.msra.mxu0 0.0
  %1835 = vmatprep.subr.mxu0 0.0
  %1836 = vmatpush1.msra.mxu0 0.0
  %1837 = vmatprep.subr.mxu0 0.0
  %1838 = vmatpush1.msra.mxu0 0.0
  %1839 = vmatprep.subr.mxu0 0.0
  %1840 = vmatpush1.msra.mxu0 0.0
  %1841 = vmatprep.subr.mxu0 0.0
  %1842 = vmatpush1.msra.mxu0 0.0
  %1843 = vmatprep.subr.mxu0 0.0
  %1844 = vmatpush1.msra.mxu0 0.0
  %1845 = vmatprep.subr.mxu0 0.0
  %1846 = vmatpush1.msra.mxu0 0.0
  %1847 = vmatprep.subr.mxu0 0.0
  %1848 = vmatpush1.msra.mxu0 0.0
  %1849 = vmatprep.subr.mxu0 0.0
  %1850 = vmatpush1.msra.mxu0 0.0
  %1851 = vmatprep.subr.mxu0 0.0
  %1852 = vmatpush1.msra.mxu0 0.0
  %1853 = vmatprep.subr.mxu0 0.0
  %1854 = vmatpush1.msra.mxu0 0.0
  %1855 = vmatprep.subr.mxu0 0.0
  %1856 = vmatpush1.msra.mxu0 0.0
  %1857 = vmatprep.subr.mxu0 0.0
  %1858 = vmatpush1.msra.mxu0 0.0
  %1859 = vmatprep.subr.mxu0 0.0
  %1860 = vmatpush1.msra.mxu0 0.0
  %1861 = vmatprep.subr.mxu0 0.0
  %1862 = vmatpush1.msra.mxu0 0.0
  %1863 = vmatprep.subr.mxu0 0.0
  %1864 = vmatpush1.msra.mxu0 0.0
  %1865 = vmatprep.subr.mxu0 0.0
  %1866 = vmatpush1.msra.mxu0 0.0
  %1867 = vmatprep.subr.mxu0 0.0
  %1868 = vmatpush1.msra.mxu0 0.0
  %1869 = vmatprep.subr.mxu0 0.0
  %1870 = vmatpush1.msra.mxu0 0.0
  %1871 = vmatprep.subr.mxu0 0.0
  %1872 = vmatpush1.msra.mxu0 0.0
  %1873 = vmatprep.subr.mxu0 0.0
  %1874 = vmatpush1.msra.mxu0 0.0
  %1875 = vmatprep.subr.mxu0 0.0
  %1876 = vmatpush1.msra.mxu0 0.0
  %1877 = vmatprep.subr.mxu0 0.0
  %1878 = vmatpush1.msra.mxu0 0.0
  %1879 = vmatprep.subr.mxu0 0.0
  %1880 = vmatpush1.msra.mxu0 0.0
  %1881 = vmatprep.subr.mxu0 0.0
  %1882 = vmatpush1.msra.mxu0 0.0
  %1883 = vmatprep.subr.mxu0 0.0
  %1884 = vmatpush1.msra.mxu0 0.0
  %1885 = vmatprep.subr.mxu0 0.0
  %1886 = vmatpush1.msra.mxu0 0.0
  %1887 = vmatprep.mubr.f32.mxu0 0.0
  %1888 = vmatmul.mubr.f32.gmra.mrb[0].mxu0 %v1819
  %v1889 = vpop.f32.mrb[0].mxu0
  %v1890 = vadd.f32 %v1104, %v1889
  %v1891 = vpop.f32.mrb[0].mxu0
  %1892 = vmatprep.mubr.f32.mxu0 0.0
  %1893 = vmatmul.mubr.f32.gmra.mrb[0].mxu0 %v1821
  %v1894 = vpop.f32.mrb[0].mxu0
  %v1895 = vadd.f32 %v1104, %v1894
  %v1896 = vpop.f32.mrb[0].mxu0
  %1897 = vdwg.mxu0
  %v1898 = vadd.f32 %v1010, %v1890
  %v1899 = vadd.f32 %v1016, %v1895
  %v1900 = vxor.u32 %v1898, 2147483648
  %v1901 = vxor.u32 %v1899, 2147483648
  %v1902 = vmul.f32 %v1900, 1.442695
  %v1903 = vpow.pop %v1902
  %v1904 = vmul.f32 %v1901, 1.442695
  %v1905 = vpow.pop %v1904
  %v1906 = vadd.f32 %v1903, 1.0
  %v1907 = vadd.f32 %v1905, 1.0
  %v1908 = vrcp.pop %v1906
  %v1909 = vmul.f32 1.0, %v1908
  %v1910 = vrcp.pop %v1907
  %v1911 = vmul.f32 1.0, %v1910
  %1914 = vrot.lane.b32.xlu0 %v1890, 64
  %v1915 = vpop.permute.xlu0 %1914
  %1916 = vrot.lane.b32.xlu0 %v1895, 64
  %v1917 = vpop.permute.xlu0 %1916
  %v1920 = vmul.f32 %v1909, %v1915
  %v1921 = vmul.f32 %v1911, %v1917
  %1924 = vrot.lane.b32.xlu0 %v1920, 64
  %v1925 = vpop.permute.xlu0 %1924
  %1926 = vrot.lane.b32.xlu0 %v1921, 64
  %v1927 = vpop.permute.xlu0 %1926
  %v1930 = vadd.f32 %v1010, %v1925
  %v1931 = vadd.f32 %v1016, %v1927
  %v1932 = vtanh.pop %v1930
  %v1933 = vtanh.pop %v1931
  %v1934 = vsub.f32 1.0, %v1909
  %v1935 = vsub.f32 1.0, %v1911
  %1938 = vrot.lane.b32.xlu0 %v1932, 96
  %v1939 = vpop.permute.xlu0 %1938
  %1940 = vrot.lane.b32.xlu0 %v1933, 96
  %v1941 = vpop.permute.xlu0 %1940
  %v1944 = vmul.f32 %v1934, %v1939
  %v1945 = vmul.f32 %v1935, %v1941
  %v1946 = vmul.f32 %v1909, %v1807
  %v1947 = vmul.f32 %v1911, %v1808
  %v1948 = vadd.f32 %v1944, %v1946
  %v1949 = vadd.f32 %v1945, %v1947
  %1950 = vst.msk [vmem:[#allocation2 + $0x8] sm:$0xff] %vm1377, %v1948
  %1951 = vst.msk [vmem:[#allocation2 + $0x18] sm:$0xff] %vm1377, %v1949
  %1954 = vrot.lane.b32.xlu0 %v1948, 96
  %v1955 = vpop.permute.xlu0 %1954
  %1956 = vrot.lane.b32.xlu0 %v1949, 96
  %v1957 = vpop.permute.xlu0 %1956
  %v1958 = vsel %vm44, %v1955, 0
  %v1960 = vsel %vm44, %v1957, 0
  %1962 = vmatprep.subr.mxu0 0.0
  %1963 = vmatpush1.msra.mxu0 %v1095
  %1964 = vmatprep.subr.mxu0 0.0
  %1965 = vmatpush1.msra.mxu0 %v1096
  %1966 = vmatprep.subr.mxu0 0.0
  %1967 = vmatpush1.msra.mxu0 %v1097
  %1968 = vmatprep.subr.mxu0 0.0
  %1969 = vmatpush1.msra.mxu0 %v1098
  %1970 = vmatprep.subr.mxu0 0.0
  %1971 = vmatpush1.msra.mxu0 0.0
  %1972 = vmatprep.subr.mxu0 0.0
  %1973 = vmatpush1.msra.mxu0 0.0
  %1974 = vmatprep.subr.mxu0 0.0
  %1975 = vmatpush1.msra.mxu0 0.0
  %1976 = vmatprep.subr.mxu0 0.0
  %1977 = vmatpush1.msra.mxu0 0.0
  %1978 = vmatprep.subr.mxu0 0.0
  %1979 = vmatpush1.msra.mxu0 0.0
  %1980 = vmatprep.subr.mxu0 0.0
  %1981 = vmatpush1.msra.mxu0 0.0
  %1982 = vmatprep.subr.mxu0 0.0
  %1983 = vmatpush1.msra.mxu0 0.0
  %1984 = vmatprep.subr.mxu0 0.0
  %1985 = vmatpush1.msra.mxu0 0.0
  %1986 = vmatprep.subr.mxu0 0.0
  %1987 = vmatpush1.msra.mxu0 0.0
  %1988 = vmatprep.subr.mxu0 0.0
  %1989 = vmatpush1.msra.mxu0 0.0
  %1990 = vmatprep.subr.mxu0 0.0
  %1991 = vmatpush1.msra.mxu0 0.0
  %1992 = vmatprep.subr.mxu0 0.0
  %1993 = vmatpush1.msra.mxu0 0.0
  %1994 = vmatprep.subr.mxu0 0.0
  %1995 = vmatpush1.msra.mxu0 0.0
  %1996 = vmatprep.subr.mxu0 0.0
  %1997 = vmatpush1.msra.mxu0 0.0
  %1998 = vmatprep.subr.mxu0 0.0
  %1999 = vmatpush1.msra.mxu0 0.0
  %2000 = vmatprep.subr.mxu0 0.0
  %2001 = vmatpush1.msra.mxu0 0.0
  %2002 = vmatprep.subr.mxu0 0.0
  %2003 = vmatpush1.msra.mxu0 0.0
  %2004 = vmatprep.subr.mxu0 0.0
  %2005 = vmatpush1.msra.mxu0 0.0
  %2006 = vmatprep.subr.mxu0 0.0
  %2007 = vmatpush1.msra.mxu0 0.0
  %2008 = vmatprep.subr.mxu0 0.0
  %2009 = vmatpush1.msra.mxu0 0.0
  %2010 = vmatprep.subr.mxu0 0.0
  %2011 = vmatpush1.msra.mxu0 0.0
  %2012 = vmatprep.subr.mxu0 0.0
  %2013 = vmatpush1.msra.mxu0 0.0
  %2014 = vmatprep.subr.mxu0 0.0
  %2015 = vmatpush1.msra.mxu0 0.0
  %2016 = vmatprep.subr.mxu0 0.0
  %2017 = vmatpush1.msra.mxu0 0.0
  %2018 = vmatprep.subr.mxu0 0.0
  %2019 = vmatpush1.msra.mxu0 0.0
  %2020 = vmatprep.subr.mxu0 0.0
  %2021 = vmatpush1.msra.mxu0 0.0
  %2022 = vmatprep.subr.mxu0 0.0
  %2023 = vmatpush1.msra.mxu0 0.0
  %2024 = vmatprep.subr.mxu0 0.0
  %2025 = vmatpush1.msra.mxu0 0.0
  %2026 = vmatprep.mubr.f32.mxu0 0.0
  %2027 = vmatmul.mubr.f32.gmra.mrb[0].mxu0 %v1958
  %v2028 = vpop.f32.mrb[0].mxu0
  %v2029 = vadd.f32 %v1104, %v2028
  %v2030 = vpop.f32.mrb[0].mxu0
  %2031 = vmatprep.mubr.f32.mxu0 0.0
  %2032 = vmatmul.mubr.f32.gmra.mrb[0].mxu0 %v1960
  %v2033 = vpop.f32.mrb[0].mxu0
  %v2034 = vadd.f32 %v1104, %v2033
  %v2035 = vpop.f32.mrb[0].mxu0
  %2036 = vdwg.mxu0
  %v2037 = vadd.f32 %v1085, %v2029
  %v2038 = vadd.f32 %v1091, %v2034
  %v2039 = vxor.u32 %v2037, 2147483648
  %v2040 = vxor.u32 %v2038, 2147483648
  %v2041 = vmul.f32 %v2039, 1.442695
  %v2042 = vpow.pop %v2041
  %v2043 = vmul.f32 %v2040, 1.442695
  %v2044 = vpow.pop %v2043
  %v2045 = vadd.f32 %v2042, 1.0
  %v2046 = vadd.f32 %v2044, 1.0
  %v2047 = vrcp.pop %v2045
  %v2048 = vmul.f32 1.0, %v2047
  %v2049 = vrcp.pop %v2046
  %v2050 = vmul.f32 1.0, %v2049
  %2053 = vrot.lane.b32.xlu0 %v2029, 64
  %v2054 = vpop.permute.xlu0 %2053
  %2055 = vrot.lane.b32.xlu0 %v2034, 64
  %v2056 = vpop.permute.xlu0 %2055
  %v2059 = vmul.f32 %v2048, %v2054
  %v2060 = vmul.f32 %v2050, %v2056
  %2063 = vrot.lane.b32.xlu0 %v2059, 64
  %v2064 = vpop.permute.xlu0 %2063
  %2065 = vrot.lane.b32.xlu0 %v2060, 64
  %v2066 = vpop.permute.xlu0 %2065
  %v2069 = vadd.f32 %v1085, %v2064
  %v2070 = vadd.f32 %v1091, %v2066
  %v2071 = vtanh.pop %v2069
  %v2072 = vtanh.pop %v2070
  %v2073 = vsub.f32 1.0, %v2048
  %v2074 = vsub.f32 1.0, %v2050
  %2077 = vrot.lane.b32.xlu0 %v2071, 96
  %v2078 = vpop.permute.xlu0 %2077
  %2079 = vrot.lane.b32.xlu0 %v2072, 96
  %v2080 = vpop.permute.xlu0 %2079
  %v2083 = vmul.f32 %v2073, %v2078
  %v2084 = vmul.f32 %v2074, %v2080
  %v2085 = vmul.f32 %v2048, %v1948
  %v2086 = vmul.f32 %v2050, %v1949
  %v2087 = vadd.f32 %v2083, %v2085
  %v2088 = vadd.f32 %v2084, %v2086
  %2091 = vrot.lane.b32.xlu0 %v2087, 32
  %v2092 = vpop.permute.xlu0 %2091
  %2093 = vrot.lane.b32.xlu0 %v2088, 32
  %v2094 = vpop.permute.xlu0 %2093
  %2097 = vst.msk [vmem:[#allocation2 + $0x8] sm:$0xff] %vm1525, %v2092
  %2098 = vst.msk [vmem:[#allocation2 + $0x18] sm:$0xff] %vm1525, %v2094
  %2099 = vrot.lane.b32.xlu0 %v2087, 96
  %v2100 = vpop.permute.xlu0 %2099
  %2101 = vrot.lane.b32.xlu0 %v2088, 96
  %v2102 = vpop.permute.xlu0 %2101
  %v2103 = vsel %vm44, %v2100, 0
  %v2105 = vsel %vm44, %v2102, 0
  %2107 = vmatprep.subr.mxu0 0.0
  %2108 = vmatpush1.msra.mxu0 %v1095
  %2109 = vmatprep.subr.mxu0 0.0
  %2110 = vmatpush1.msra.mxu0 %v1096
  %2111 = vmatprep.subr.mxu0 0.0
  %2112 = vmatpush1.msra.mxu0 %v1097
  %2113 = vmatprep.subr.mxu0 0.0
  %2114 = vmatpush1.msra.mxu0 %v1098
  %2115 = vmatprep.subr.mxu0 0.0
  %2116 = vmatpush1.msra.mxu0 0.0
  %2117 = vmatprep.subr.mxu0 0.0
  %2118 = vmatpush1.msra.mxu0 0.0
  %2119 = vmatprep.subr.mxu0 0.0
  %2120 = vmatpush1.msra.mxu0 0.0
  %2121 = vmatprep.subr.mxu0 0.0
  %2122 = vmatpush1.msra.mxu0 0.0
  %2123 = vmatprep.subr.mxu0 0.0
  %2124 = vmatpush1.msra.mxu0 0.0
  %2125 = vmatprep.subr.mxu0 0.0
  %2126 = vmatpush1.msra.mxu0 0.0
  %2127 = vmatprep.subr.mxu0 0.0
  %2128 = vmatpush1.msra.mxu0 0.0
  %2129 = vmatprep.subr.mxu0 0.0
  %2130 = vmatpush1.msra.mxu0 0.0
  %2131 = vmatprep.subr.mxu0 0.0
  %2132 = vmatpush1.msra.mxu0 0.0
  %2133 = vmatprep.subr.mxu0 0.0
  %2134 = vmatpush1.msra.mxu0 0.0
  %2135 = vmatprep.subr.mxu0 0.0
  %2136 = vmatpush1.msra.mxu0 0.0
  %2137 = vmatprep.subr.mxu0 0.0
  %2138 = vmatpush1.msra.mxu0 0.0
  %2139 = vmatprep.subr.mxu0 0.0
  %2140 = vmatpush1.msra.mxu0 0.0
  %2141 = vmatprep.subr.mxu0 0.0
  %2142 = vmatpush1.msra.mxu0 0.0
  %2143 = vmatprep.subr.mxu0 0.0
  %2144 = vmatpush1.msra.mxu0 0.0
  %2145 = vmatprep.subr.mxu0 0.0
  %2146 = vmatpush1.msra.mxu0 0.0
  %2147 = vmatprep.subr.mxu0 0.0
  %2148 = vmatpush1.msra.mxu0 0.0
  %2149 = vmatprep.subr.mxu0 0.0
  %2150 = vmatpush1.msra.mxu0 0.0
  %2151 = vmatprep.subr.mxu0 0.0
  %2152 = vmatpush1.msra.mxu0 0.0
  %2153 = vmatprep.subr.mxu0 0.0
  %2154 = vmatpush1.msra.mxu0 0.0
  %2155 = vmatprep.subr.mxu0 0.0
  %2156 = vmatpush1.msra.mxu0 0.0
  %2157 = vmatprep.subr.mxu0 0.0
  %2158 = vmatpush1.msra.mxu0 0.0
  %2159 = vmatprep.subr.mxu0 0.0
  %2160 = vmatpush1.msra.mxu0 0.0
  %2161 = vmatprep.subr.mxu0 0.0
  %2162 = vmatpush1.msra.mxu0 0.0
  %2163 = vmatprep.subr.mxu0 0.0
  %2164 = vmatpush1.msra.mxu0 0.0
  %2165 = vmatprep.subr.mxu0 0.0
  %2166 = vmatpush1.msra.mxu0 0.0
  %2167 = vmatprep.subr.mxu0 0.0
  %2168 = vmatpush1.msra.mxu0 0.0
  %2169 = vmatprep.subr.mxu0 0.0
  %2170 = vmatpush1.msra.mxu0 0.0
  %2171 = vmatprep.mubr.f32.mxu0 0.0
  %2172 = vmatmul.mubr.f32.gmra.mrb[0].mxu0 %v2103
  %v2173 = vpop.f32.mrb[0].mxu0
  %v2174 = vadd.f32 %v1104, %v2173
  %v2175 = vpop.f32.mrb[0].mxu0
  %2176 = vmatprep.mubr.f32.mxu0 0.0
  %2177 = vmatmul.mubr.f32.gmra.mrb[0].mxu0 %v2105
  %v2178 = vpop.f32.mrb[0].mxu0
  %v2179 = vadd.f32 %v1104, %v2178
  %v2180 = vpop.f32.mrb[0].mxu0
  %2181 = vdwg.mxu0
  %v2182 = vadd.f32 %v1087, %v2174
  %v2183 = vadd.f32 %v1093, %v2179
  %v2184 = vxor.u32 %v2182, 2147483648
  %v2185 = vxor.u32 %v2183, 2147483648
  %v2186 = vmul.f32 %v2184, 1.442695
  %v2187 = vpow.pop %v2186
  %v2188 = vmul.f32 %v2185, 1.442695
  %v2189 = vpow.pop %v2188
  %v2190 = vadd.f32 %v2187, 1.0
  %v2191 = vadd.f32 %v2189, 1.0
  %v2192 = vrcp.pop %v2190
  %v2193 = vmul.f32 1.0, %v2192
  %v2194 = vrcp.pop %v2191
  %v2195 = vmul.f32 1.0, %v2194
  %2198 = vrot.lane.b32.xlu0 %v2174, 64
  %v2199 = vpop.permute.xlu0 %2198
  %2200 = vrot.lane.b32.xlu0 %v2179, 64
  %v2201 = vpop.permute.xlu0 %2200
  %v2204 = vmul.f32 %v2193, %v2199
  %v2205 = vmul.f32 %v2195, %v2201
  %2208 = vrot.lane.b32.xlu0 %v2204, 64
  %v2209 = vpop.permute.xlu0 %2208
  %2210 = vrot.lane.b32.xlu0 %v2205, 64
  %v2211 = vpop.permute.xlu0 %2210
  %v2214 = vadd.f32 %v1087, %v2209
  %v2215 = vadd.f32 %v1093, %v2211
  %v2216 = vtanh.pop %v2214
  %v2217 = vtanh.pop %v2215
  %v2218 = vsub.f32 1.0, %v2193
  %v2219 = vsub.f32 1.0, %v2195
  %2222 = vrot.lane.b32.xlu0 %v2216, 96
  %v2223 = vpop.permute.xlu0 %2222
  %2224 = vrot.lane.b32.xlu0 %v2217, 96
  %v2225 = vpop.permute.xlu0 %2224
  %v2228 = vmul.f32 %v2218, %v2223
  %v2229 = vmul.f32 %v2219, %v2225
  %v2230 = vmul.f32 %v2193, %v2087
  %v2231 = vmul.f32 %v2195, %v2088
  %v2232 = vadd.f32 %v2228, %v2230
  %v2233 = vadd.f32 %v2229, %v2231
  %2236 = vrot.lane.b32.xlu0 %v2232, 64
  %v2237 = vpop.permute.xlu0 %2236
  %2238 = vrot.lane.b32.xlu0 %v2233, 64
  %v2239 = vpop.permute.xlu0 %2238
  %2242 = vst.msk [vmem:[#allocation2 + $0x8] sm:$0xff] %vm1671, %v2237
  %2243 = vst.msk [vmem:[#allocation2 + $0x18] sm:$0xff] %vm1671, %v2239
  %v2244 = vld [vmem:[#allocation2] sm:$0xff]
  %v2245 = vld [vmem:[#allocation2 + $0x8] sm:$0xff]
  %v2246 = vld [vmem:[#allocation2 + $0x10] sm:$0xff]
  %v2247 = vld [vmem:[#allocation2 + $0x18] sm:$0xff]
  %v2248 = vld [vmem:[%s9] sm:$0xff]
  %v2249 = vld [vmem:[%s9 + $0x8] sm:$0xff]
  %v2250 = vld [vmem:[%s9 + $0x10] sm:$0xff]
  %v2251 = vld [vmem:[%s9 + $0x18] sm:$0xff]
  %v2252 = vld [vmem:[%s9 + $0x20] sm:$0xff]
  %v2253 = vld [vmem:[%s9 + $0x28] sm:$0xff]
  %v2254 = vld [vmem:[%s9 + $0x30] sm:$0xff]
  %v2255 = vld [vmem:[%s9 + $0x38] sm:$0xff]
  %v2256 = vld [vmem:[%s9 + $0x40] sm:$0xff]
  %v2257 = vld [vmem:[%s9 + $0x48] sm:$0xff]
  %v2258 = vld [vmem:[%s9 + $0x50] sm:$0xff]
  %v2259 = vld [vmem:[%s9 + $0x58] sm:$0xff]
  %v2260 = vld [vmem:[%s9 + $0x60] sm:$0xff]
  %v2261 = vld [vmem:[%s9 + $0x68] sm:$0xff]
  %v2262 = vld [vmem:[%s9 + $0x70] sm:$0xff]
  %v2263 = vld [vmem:[%s9 + $0x78] sm:$0xff]
  %v2264 = vld [vmem:[%s9 + $0x80] sm:$0xff]
  %v2265 = vld [vmem:[%s9 + $0x88] sm:$0xff]
  %v2266 = vld [vmem:[%s9 + $0x90] sm:$0xff]
  %v2267 = vld [vmem:[%s9 + $0x98] sm:$0xff]
  %v2268 = vld [vmem:[%s9 + $0xa0] sm:$0xff]
  %v2269 = vld [vmem:[%s9 + $0xa8] sm:$0xff]
  %v2270 = vld [vmem:[%s9 + $0xb0] sm:$0xff]
  %v2271 = vld [vmem:[%s9 + $0xb8] sm:$0xff]
  %v2272 = vld [vmem:[%s9 + $0xc0] sm:$0xff]
  %v2273 = vld [vmem:[%s9 + $0xc8] sm:$0xff]
  %v2274 = vld [vmem:[%s9 + $0xd0] sm:$0xff]
  %v2275 = vld [vmem:[%s9 + $0xd8] sm:$0xff]
  %v2276 = vld [vmem:[%s9 + $0xe0] sm:$0xff]
  %v2277 = vld [vmem:[%s9 + $0xe8] sm:$0xff]
  %v2278 = vld [vmem:[%s9 + $0xf0] sm:$0xff]
  %v2279 = vld [vmem:[%s9 + $0xf8] sm:$0xff]
  %v2280 = vld [vmem:[%s10] sm:$0x1]
  %v2282 = vlaneseq
  %v2283 = vshrl.u32 %v2282, 7
  %v2284 = vsub.s32 0, %v2283
  %v2285 = vrot.slane %v2280, %v2284
  %2287 = vmatprep.subr.mxu0 0.0
  %2288 = vmatpush1.msra.mxu0 %v2248
  %2289 = vmatprep.subr.mxu0 0.0
  %2290 = vmatpush1.msra.mxu0 %v2249
  %2291 = vmatprep.subr.mxu0 0.0
  %2292 = vmatpush1.msra.mxu0 %v2250
  %2293 = vmatprep.subr.mxu0 0.0
  %2294 = vmatpush1.msra.mxu0 %v2251
  %2295 = vmatprep.subr.mxu0 0.0
  %2296 = vmatpush1.msra.mxu0 %v2252
  %2297 = vmatprep.subr.mxu0 0.0
  %2298 = vmatpush1.msra.mxu0 %v2253
  %2299 = vmatprep.subr.mxu0 0.0
  %2300 = vmatpush1.msra.mxu0 %v2254
  %2301 = vmatprep.subr.mxu0 0.0
  %2302 = vmatpush1.msra.mxu0 %v2255
  %2303 = vmatprep.subr.mxu0 0.0
  %2304 = vmatpush1.msra.mxu0 %v2256
  %2305 = vmatprep.subr.mxu0 0.0
  %2306 = vmatpush1.msra.mxu0 %v2257
  %2307 = vmatprep.subr.mxu0 0.0
  %2308 = vmatpush1.msra.mxu0 %v2258
  %2309 = vmatprep.subr.mxu0 0.0
  %2310 = vmatpush1.msra.mxu0 %v2259
  %2311 = vmatprep.subr.mxu0 0.0
  %2312 = vmatpush1.msra.mxu0 %v2260
  %2313 = vmatprep.subr.mxu0 0.0
  %2314 = vmatpush1.msra.mxu0 %v2261
  %2315 = vmatprep.subr.mxu0 0.0
  %2316 = vmatpush1.msra.mxu0 %v2262
  %2317 = vmatprep.subr.mxu0 0.0
  %2318 = vmatpush1.msra.mxu0 %v2263
  %2319 = vmatprep.subr.mxu0 0.0
  %2320 = vmatpush1.msra.mxu0 %v2264
  %2321 = vmatprep.subr.mxu0 0.0
  %2322 = vmatpush1.msra.mxu0 %v2265
  %2323 = vmatprep.subr.mxu0 0.0
  %2324 = vmatpush1.msra.mxu0 %v2266
  %2325 = vmatprep.subr.mxu0 0.0
  %2326 = vmatpush1.msra.mxu0 %v2267
  %2327 = vmatprep.subr.mxu0 0.0
  %2328 = vmatpush1.msra.mxu0 %v2268
  %2329 = vmatprep.subr.mxu0 0.0
  %2330 = vmatpush1.msra.mxu0 %v2269
  %2331 = vmatprep.subr.mxu0 0.0
  %2332 = vmatpush1.msra.mxu0 %v2270
  %2333 = vmatprep.subr.mxu0 0.0
  %2334 = vmatpush1.msra.mxu0 %v2271
  %2335 = vmatprep.subr.mxu0 0.0
  %2336 = vmatpush1.msra.mxu0 %v2272
  %2337 = vmatprep.subr.mxu0 0.0
  %2338 = vmatpush1.msra.mxu0 %v2273
  %2339 = vmatprep.subr.mxu0 0.0
  %2340 = vmatpush1.msra.mxu0 %v2274
  %2341 = vmatprep.subr.mxu0 0.0
  %2342 = vmatpush1.msra.mxu0 %v2275
  %2343 = vmatprep.subr.mxu0 0.0
  %2344 = vmatpush1.msra.mxu0 %v2276
  %2345 = vmatprep.subr.mxu0 0.0
  %2346 = vmatpush1.msra.mxu0 %v2277
  %2347 = vmatprep.subr.mxu0 0.0
  %2348 = vmatpush1.msra.mxu0 %v2278
  %2349 = vmatprep.subr.mxu0 0.0
  %2350 = vmatpush1.msra.mxu0 %v2279
  %2351 = vmatprep.mubr.f32.mxu0 %v2245
  %2352 = vmatmul.mubr.f32.gmra.mrb[0].mxu0 %v2244
  %v2353 = vpop.f32.mrb[0].mxu0
  %v2354 = vadd.f32 %v2285, %v2353
  %v2355 = vpop.f32.mrb[0].mxu0
  %2356 = vmatprep.mubr.f32.mxu0 %v2247
  %2357 = vmatmul.mubr.f32.gmra.mrb[0].mxu0 %v2246
  %v2358 = vpop.f32.mrb[0].mxu0
  %v2359 = vadd.f32 %v2285, %v2358
  %v2360 = vpop.f32.mrb[0].mxu0
  %2361 = vdwg.mxu0
  %2362 = vst [vmem:[%s11] sm:$0xff] %v2354
  %2363 = vst [vmem:[%s11 + $0x8] sm:$0xff] %v2359
  // Predicated region
  $region46: #{gatgru_forward.1} parent=0 // pred_check
    _
  $region47: #{gatgru_forward.1} parent=0 // pred_check_branch
    %2365 = sbr.rel (0) target = $region49
  $region48: #{gatgru_forward.1} parent=0 // pred_region
    _
  $region49: #{gatgru_forward.1} parent=0 // pred_fallthru
    _
  // Predicated region
  $region50: #{gatgru_forward.1} parent=0 // pred_check
    _
  $region51: #{gatgru_forward.1} parent=0 // pred_check_branch
    %2367 = sbr.rel (0) target = $region53
  $region52: #{gatgru_forward.1} parent=0 // pred_region
    _
  $region53: #{gatgru_forward.1} parent=0 // pred_fallthru
    _

</llo_original>
